<compile_context>
chip_gen: v7x
topology: tpu7x:2x2x1
jax: 0.10.0
libtpu: 0.0.40
codegen_flags: <defaults>
</compile_context>

<pallas_src>
import functools
import re

import jax
import jax.numpy as jnp
from jax.experimental import pallas as pl
from jax.experimental.pallas import tpu as pltpu


def _round_up(x, m):
    return ((x + m - 1) // m) * m


def _cdiv(a, b):
    return (a + b - 1) // b


def _tpu_generation():
    """Best-effort TPU generation (5, 6, 7, ...); None if unknown."""
    try:
        kind = jax.devices()[0].device_kind
        m = re.search(r"(\d+)", kind)
        if m:
            return int(m.group(1))
    except Exception:
        pass
    return None


def mlp_kernel(x_ref,
               w1_ref, b1_ref,
               w2_ref, b2_ref,
               w3_ref, b3_ref,
               w4_ref, b4_ref,
               o_ref, *, bf16_epilogue):
    def hidden_layer(h, w_ref, b_ref):
        acc = jnp.dot(h, w_ref[...], preferred_element_type=jnp.float32)
        if bf16_epilogue:
            # v6e/v7x: packed-bf16 bias add + ReLU (biases pre-cast to bf16);
            # halves the VALU element passes per layer.
            return jnp.maximum(acc.astype(jnp.bfloat16) + b_ref[...], 0)
        # v5e: no bf16 VPU -> f32 epilogue, then cast for the next matmul.
        return jnp.maximum(acc + b_ref[...], 0.0).astype(jnp.bfloat16)

    h = hidden_layer(x_ref[...], w1_ref, b1_ref)   # fc1 + relu
    h = hidden_layer(h, w2_ref, b2_ref)            # fc2 + relu
    h = hidden_layer(h, w3_ref, b3_ref)            # fc3 + relu
    acc = jnp.dot(h, w4_ref[...], preferred_element_type=jnp.float32)
    o_ref[...] = (acc + b4_ref[...]).astype(o_ref.dtype)   # fc4, lane-dense store


def prepare_params(params, *, bf16_epilogue=None):
    """Pad + cast weights/biases ONCE; reuse the result across forward calls."""
    if bf16_epilogue is None:
        gen = _tpu_generation()
        bf16_epilogue = gen is not None and gen >= 6   # bf16 VPU on v6e/v7x

    n_feature = params["w1"].shape[0]
    n_hidden = params["w1"].shape[1]
    n_output = params["w4"].shape[1]

    # Lane / contraction dims padded to multiples of 128 (MXU / VPU lanes).
    F_pad = _round_up(n_feature, 128)
    H_pad = _round_up(n_hidden, 128)
    O_pad = _round_up(n_output, 128)

    def pad2(a, rows, cols, dtype):
        a = jnp.asarray(a, dtype)
        return jnp.pad(a, ((0, rows - a.shape[0]), (0, cols - a.shape[1])))

    hb_dtype = jnp.bfloat16 if bf16_epilogue else jnp.float32
    prepared = dict(
        w1=pad2(params["w1"], F_pad, H_pad, jnp.bfloat16),
        w2=pad2(params["w2"], H_pad, H_pad, jnp.bfloat16),
        w3=pad2(params["w3"], H_pad, H_pad, jnp.bfloat16),
        w4=pad2(params["w4"], H_pad, O_pad, jnp.bfloat16),
        b1=pad2(params["b1"], 1, H_pad, hb_dtype),
        b2=pad2(params["b2"], 1, H_pad, hb_dtype),
        b3=pad2(params["b3"], 1, H_pad, hb_dtype),
        b4=pad2(params["b4"], 1, O_pad, jnp.float32),   # final bias stays f32
    )
    meta = dict(n_feature=n_feature, n_hidden=n_hidden, n_output=n_output,
                F_pad=F_pad, H_pad=H_pad, O_pad=O_pad,
                bf16_epilogue=bf16_epilogue)
    return prepared, meta


def net_forward(x, prepared, meta, *, block_batch=512, out_dtype=jnp.float32):
    """x: (B, n_feature) f32. prepared/meta from prepare_params()."""
    B, n_feature = x.shape
    assert n_feature == meta["n_feature"]
    F_pad, H_pad, O_pad = meta["F_pad"], meta["H_pad"], meta["O_pad"]
    gen = _tpu_generation()

    # Batch tiling: multiple of 16 (bf16 (16,128) tile), sized to minimize
    # zero-row padding; on v7x keep >= 2 grid steps so both TCs get work.
    B16 = _round_up(B, 16)
    num_steps = _cdiv(B16, max(16, _round_up(block_batch, 16)))
    if gen == 7 and B16 >= 32:
        num_steps = max(num_steps, 2)
    TB = _round_up(_cdiv(B, num_steps), 16)
    num_steps = _cdiv(B, TB)
    B_pad = num_steps * TB

    xp = jnp.pad(x.astype(jnp.bfloat16),
                 ((0, B_pad - B), (0, F_pad - n_feature)))

    # VMEM budget: 64 MiB per TC on v7x, 128 MiB on v5e/v6e (leave headroom).
    vmem_limit = (56 if gen == 7 else 100) * 1024 * 1024
    resident_bytes = 2 * (F_pad * H_pad + 2 * H_pad * H_pad + H_pad * O_pad)
    # TODO(synk): for very large n_hidden (H_pad >= ~3-4K on v7x) the resident
    # weights no longer fit in 64 MiB/TC; stream the fc2/fc3 weight tiles over
    # a K/N grid axis (or pltpu.emit_pipeline) instead of full residency.

    flops = 2 * B_pad * (F_pad * H_pad + 2 * H_pad * H_pad + H_pad * O_pad)
    bytes_accessed = (xp.size * 2
                      + B_pad * O_pad * jnp.dtype(out_dtype).itemsize
                      + resident_bytes
                      + (3 * H_pad + O_pad) * 4)

    kernel = functools.partial(mlp_kernel, bf16_epilogue=meta["bf16_epilogue"])

    def run(weight_pipeline_mode):
        def resident(shape):
            # Full-array block, constant index_map -> fetched once, stays
            # VMEM-resident across grid steps.
            if weight_pipeline_mode is None:
                return pl.BlockSpec(shape, lambda i: (0, 0))
            return pl.BlockSpec(shape, lambda i: (0, 0),
                                pipeline_mode=weight_pipeline_mode)

        return pl.pallas_call(
            kernel,
            out_shape=jax.ShapeDtypeStruct((B_pad, O_pad), out_dtype),
            grid=(num_steps,),
            in_specs=[
                pl.BlockSpec((TB, F_pad), lambda i: (i, 0)),     # x: batch-tiled
                resident((F_pad, H_pad)), resident((1, H_pad)),  # fc1
                resident((H_pad, H_pad)), resident((1, H_pad)),  # fc2
                resident((H_pad, H_pad)), resident((1, H_pad)),  # fc3
                resident((H_pad, O_pad)), resident((1, O_pad)),  # fc4
            ],
            out_specs=pl.BlockSpec((TB, O_pad), lambda i: (i, 0)),
            compiler_params=pltpu.CompilerParams(
                dimension_semantics=("parallel",),   # shard batch across TCs (v7x)
                vmem_limit_bytes=vmem_limit,
            ),
            cost_estimate=pl.CostEstimate(
                flops=flops, transcendentals=0, bytes_accessed=bytes_accessed),
        )(xp, prepared["w1"], prepared["b1"], prepared["w2"], prepared["b2"],
          prepared["w3"], prepared["b3"], prepared["w4"], prepared["b4"])

    try:
        # Single-buffer the resident weight/bias blocks (halves weight VMEM).
        out_padded = run(pl.Buffered(1))
    except Exception:
        # Fallback if this Mosaic/Pallas version rejects buffer_count=1.
        out_padded = run(None)

    # Slice the batch / lane padding off.
    return out_padded[:B, :meta["n_output"]]


def init_params(key, n_feature, n_hidden, n_output):
    ks = jax.random.split(key, 8)

    def lin(kw, kb, fan_in, fan_out):
        bound = 1.0 / jnp.sqrt(fan_in)
        w = jax.random.uniform(kw, (fan_in, fan_out), jnp.float32, -bound, bound)
        b = jax.random.uniform(kb, (1, fan_out), jnp.float32, -bound, bound)
        return w, b

    w1, b1 = lin(ks[0], ks[1], n_feature, n_hidden)
    w2, b2 = lin(ks[2], ks[3], n_hidden, n_hidden)
    w3, b3 = lin(ks[4], ks[5], n_hidden, n_hidden)
    w4, b4 = lin(ks[6], ks[7], n_hidden, n_output)
    return dict(w1=w1, b1=b1, w2=w2, b2=b2, w3=w3, b3=b3, w4=w4, b4=b4)


def net_forward_ref_f32(x, p):
    h = jnp.maximum(x @ p["w1"] + p["b1"], 0.0)
    h = jnp.maximum(h @ p["w2"] + p["b2"], 0.0)
    h = jnp.maximum(h @ p["w3"] + p["b3"], 0.0)
    return h @ p["w4"] + p["b4"]


def net_forward_ref_matched(x, p, *, bf16_epilogue):
    # Mirrors the kernel arithmetic: bf16 matmul operands, f32 MXU accumulate,
    # and the same epilogue precision as the selected kernel variant.
    def mm(h, w):
        return jnp.dot(h.astype(jnp.bfloat16), w.astype(jnp.bfloat16),
                       preferred_element_type=jnp.float32)

    def hidden(h, w, b):
        acc = mm(h, w)
        if bf16_epilogue:
            return jnp.maximum(acc.astype(jnp.bfloat16) + b.astype(jnp.bfloat16), 0)
        return jnp.maximum(acc + b, 0.0).astype(jnp.bfloat16)

    h = hidden(x, p["w1"], p["b1"])
    h = hidden(h, p["w2"], p["b2"])
    h = hidden(h, p["w3"], p["b3"])
    return mm(h, p["w4"]) + p["b4"]


if __name__ == "__main__":
    # Small shapes consistent with the module (batch of feature rows -> MLP).
    B, n_feature, n_hidden, n_output = 9, 32, 64, 16

    key = jax.random.PRNGKey(0)
    kx, kp = jax.random.split(key)
    x = jax.random.uniform(kx, (B, n_feature), jnp.float32)
    params = init_params(kp, n_feature, n_hidden, n_output)

    prepared, meta = prepare_params(params)     # pad / cast ONCE, reuse per call
    out = net_forward(x, prepared, meta)
    out = jax.block_until_ready(out)
    assert out.shape == (B, n_output)

    # Tight check against an arithmetic-matched reference, loose against pure-f32.
    ref_matched = net_forward_ref_matched(
        x, params, bf16_epilogue=meta["bf16_epilogue"])
    ref_f32 = net_forward_ref_f32(x, params)
    assert jnp.allclose(out, ref_matched, atol=2e-3, rtol=2e-3)
    assert jnp.allclose(out, ref_f32, atol=5e-2, rtol=5e-2)

    print("KERNEL_OK")
</pallas_src>

<mosaic_0001>
module attributes {stable_mosaic.version = 11 : i64} {
  func.func @mlp_kernel(%arg0: i32, %arg1: memref<16x128xbf16, #tpu.memory_space<vmem>>, %arg2: memref<128x128xbf16, #tpu.memory_space<vmem>>, %arg3: memref<1x128xf32, #tpu.memory_space<vmem>>, %arg4: memref<128x128xbf16, #tpu.memory_space<vmem>>, %arg5: memref<1x128xf32, #tpu.memory_space<vmem>>, %arg6: memref<128x128xbf16, #tpu.memory_space<vmem>>, %arg7: memref<1x128xf32, #tpu.memory_space<vmem>>, %arg8: memref<128x128xbf16, #tpu.memory_space<vmem>>, %arg9: memref<1x128xf32, #tpu.memory_space<vmem>>, %arg10: memref<16x128xf32, #tpu.memory_space<vmem>>) attributes {dimension_semantics = [#tpu.dimension_semantics<parallel>], iteration_bounds = array<i64: 1>, scalar_prefetch = 0 : i64, scratch_operands = 0 : i64, tpu.core_type = #tpu.core_type<tc>, window_params = [{transform_indices = @transform_0, window_bounds = array<i64: 16, 128>}, {pipeline_mode = #tpu.pipeline_mode<synchronous>, transform_indices = @transform_1, window_bounds = array<i64: 128, 128>}, {pipeline_mode = #tpu.pipeline_mode<synchronous>, transform_indices = @transform_2, window_bounds = array<i64: 1, 128>}, {pipeline_mode = #tpu.pipeline_mode<synchronous>, transform_indices = @transform_3, window_bounds = array<i64: 128, 128>}, {pipeline_mode = #tpu.pipeline_mode<synchronous>, transform_indices = @transform_4, window_bounds = array<i64: 1, 128>}, {pipeline_mode = #tpu.pipeline_mode<synchronous>, transform_indices = @transform_5, window_bounds = array<i64: 128, 128>}, {pipeline_mode = #tpu.pipeline_mode<synchronous>, transform_indices = @transform_6, window_bounds = array<i64: 1, 128>}, {pipeline_mode = #tpu.pipeline_mode<synchronous>, transform_indices = @transform_7, window_bounds = array<i64: 128, 128>}, {pipeline_mode = #tpu.pipeline_mode<synchronous>, transform_indices = @transform_8, window_bounds = array<i64: 1, 128>}, {transform_indices = @transform_9, window_bounds = array<i64: 16, 128>}]} {
    %c0 = arith.constant 0 : index
    %c0_0 = arith.constant 0 : index
    %0 = vector.load %arg1[%c0, %c0_0] : memref<16x128xbf16, #tpu.memory_space<vmem>>, vector<16x128xbf16>
    %c0_1 = arith.constant 0 : index
    %c0_2 = arith.constant 0 : index
    %1 = vector.load %arg2[%c0_1, %c0_2] : memref<128x128xbf16, #tpu.memory_space<vmem>>, vector<128x128xbf16>
    %cst = arith.constant dense<0.000000e+00> : vector<16x128xf32>
    %2 = tpu.matmul %0, %1, %cst {dimension_numbers = #tpu.dot_dimension_numbers<[1], [0], [0], [1], [0, 0, 1, 1], [], []>} : vector<16x128xbf16>, vector<128x128xbf16>, vector<16x128xf32> -> vector<16x128xf32>
    %c0_3 = arith.constant 0 : index
    %c0_4 = arith.constant 0 : index
    %3 = vector.load %arg3[%c0_3, %c0_4] : memref<1x128xf32, #tpu.memory_space<vmem>>, vector<1x128xf32>
    %4 = vector.broadcast %3 : vector<1x128xf32> to vector<16x128xf32>
    %5 = arith.addf %2, %4 : vector<16x128xf32>
    %cst_5 = arith.constant 0.000000e+00 : f32
    %6 = vector.broadcast %cst_5 : f32 to vector<16x128xf32>
    %7 = arith.maximumf %5, %6 : vector<16x128xf32>
    %8 = arith.truncf %7 : vector<16x128xf32> to vector<16x128xbf16>
    %c0_6 = arith.constant 0 : index
    %c0_7 = arith.constant 0 : index
    %9 = vector.load %arg4[%c0_6, %c0_7] : memref<128x128xbf16, #tpu.memory_space<vmem>>, vector<128x128xbf16>
    %cst_8 = arith.constant dense<0.000000e+00> : vector<16x128xf32>
    %10 = tpu.matmul %8, %9, %cst_8 {dimension_numbers = #tpu.dot_dimension_numbers<[1], [0], [0], [1], [0, 0, 1, 1], [], []>} : vector<16x128xbf16>, vector<128x128xbf16>, vector<16x128xf32> -> vector<16x128xf32>
    %c0_9 = arith.constant 0 : index
    %c0_10 = arith.constant 0 : index
    %11 = vector.load %arg5[%c0_9, %c0_10] : memref<1x128xf32, #tpu.memory_space<vmem>>, vector<1x128xf32>
    %12 = vector.broadcast %11 : vector<1x128xf32> to vector<16x128xf32>
    %13 = arith.addf %10, %12 : vector<16x128xf32>
    %cst_11 = arith.constant 0.000000e+00 : f32
    %14 = vector.broadcast %cst_11 : f32 to vector<16x128xf32>
    %15 = arith.maximumf %13, %14 : vector<16x128xf32>
    %16 = arith.truncf %15 : vector<16x128xf32> to vector<16x128xbf16>
    %c0_12 = arith.constant 0 : index
    %c0_13 = arith.constant 0 : index
    %17 = vector.load %arg6[%c0_12, %c0_13] : memref<128x128xbf16, #tpu.memory_space<vmem>>, vector<128x128xbf16>
    %cst_14 = arith.constant dense<0.000000e+00> : vector<16x128xf32>
    %18 = tpu.matmul %16, %17, %cst_14 {dimension_numbers = #tpu.dot_dimension_numbers<[1], [0], [0], [1], [0, 0, 1, 1], [], []>} : vector<16x128xbf16>, vector<128x128xbf16>, vector<16x128xf32> -> vector<16x128xf32>
    %c0_15 = arith.constant 0 : index
    %c0_16 = arith.constant 0 : index
    %19 = vector.load %arg7[%c0_15, %c0_16] : memref<1x128xf32, #tpu.memory_space<vmem>>, vector<1x128xf32>
    %20 = vector.broadcast %19 : vector<1x128xf32> to vector<16x128xf32>
    %21 = arith.addf %18, %20 : vector<16x128xf32>
    %cst_17 = arith.constant 0.000000e+00 : f32
    %22 = vector.broadcast %cst_17 : f32 to vector<16x128xf32>
    %23 = arith.maximumf %21, %22 : vector<16x128xf32>
    %24 = arith.truncf %23 : vector<16x128xf32> to vector<16x128xbf16>
    %c0_18 = arith.constant 0 : index
    %c0_19 = arith.constant 0 : index
    %25 = vector.load %arg8[%c0_18, %c0_19] : memref<128x128xbf16, #tpu.memory_space<vmem>>, vector<128x128xbf16>
    %cst_20 = arith.constant dense<0.000000e+00> : vector<16x128xf32>
    %26 = tpu.matmul %24, %25, %cst_20 {dimension_numbers = #tpu.dot_dimension_numbers<[1], [0], [0], [1], [0, 0, 1, 1], [], []>} : vector<16x128xbf16>, vector<128x128xbf16>, vector<16x128xf32> -> vector<16x128xf32>
    %c0_21 = arith.constant 0 : index
    %c0_22 = arith.constant 0 : index
    %27 = vector.load %arg9[%c0_21, %c0_22] : memref<1x128xf32, #tpu.memory_space<vmem>>, vector<1x128xf32>
    %28 = vector.broadcast %27 : vector<1x128xf32> to vector<16x128xf32>
    %29 = arith.addf %26, %28 : vector<16x128xf32>
    %c0_23 = arith.constant 0 : index
    %c0_24 = arith.constant 0 : index
    %30 = vector.load %arg10[%c0_23, %c0_24] : memref<16x128xf32, #tpu.memory_space<vmem>>, vector<16x128xf32>
    tpu.vector_store %arg10[%c0_23, %c0_24], %29 {strides = array<i32>} : memref<16x128xf32, #tpu.memory_space<vmem>>, vector<16x128xf32>,
    return
  }
  func.func @transform_0(%arg0: i32) -> (i32, i32) {
    %c0_i32 = arith.constant 0 : i32
    %c0_i32_0 = arith.constant 0 : i32
    return %arg0, %c0_i32 : i32, i32
  }
  func.func @transform_1(%arg0: i32) -> (i32, i32) {
    %c0_i32 = arith.constant 0 : i32
    %c0_i32_0 = arith.constant 0 : i32
    %c0_i32_1 = arith.constant 0 : i32
    return %c0_i32, %c0_i32_0 : i32, i32
  }
  func.func @transform_2(%arg0: i32) -> (i32, i32) {
    %c0_i32 = arith.constant 0 : i32
    %c0_i32_0 = arith.constant 0 : i32
    %c0_i32_1 = arith.constant 0 : i32
    return %c0_i32, %c0_i32_0 : i32, i32
  }
  func.func @transform_3(%arg0: i32) -> (i32, i32) {
    %c0_i32 = arith.constant 0 : i32
    %c0_i32_0 = arith.constant 0 : i32
    %c0_i32_1 = arith.constant 0 : i32
    return %c0_i32, %c0_i32_0 : i32, i32
  }
  func.func @transform_4(%arg0: i32) -> (i32, i32) {
    %c0_i32 = arith.constant 0 : i32
    %c0_i32_0 = arith.constant 0 : i32
    %c0_i32_1 = arith.constant 0 : i32
    return %c0_i32, %c0_i32_0 : i32, i32
  }
  func.func @transform_5(%arg0: i32) -> (i32, i32) {
    %c0_i32 = arith.constant 0 : i32
    %c0_i32_0 = arith.constant 0 : i32
    %c0_i32_1 = arith.constant 0 : i32
    return %c0_i32, %c0_i32_0 : i32, i32
  }
  func.func @transform_6(%arg0: i32) -> (i32, i32) {
    %c0_i32 = arith.constant 0 : i32
    %c0_i32_0 = arith.constant 0 : i32
    %c0_i32_1 = arith.constant 0 : i32
    return %c0_i32, %c0_i32_0 : i32, i32
  }
  func.func @transform_7(%arg0: i32) -> (i32, i32) {
    %c0_i32 = arith.constant 0 : i32
    %c0_i32_0 = arith.constant 0 : i32
    %c0_i32_1 = arith.constant 0 : i32
    return %c0_i32, %c0_i32_0 : i32, i32
  }
  func.func @transform_8(%arg0: i32) -> (i32, i32) {
    %c0_i32 = arith.constant 0 : i32
    %c0_i32_0 = arith.constant 0 : i32
    %c0_i32_1 = arith.constant 0 : i32
    return %c0_i32, %c0_i32_0 : i32, i32
  }
  func.func @transform_9(%arg0: i32) -> (i32, i32) {
    %c0_i32 = arith.constant 0 : i32
    %c0_i32_0 = arith.constant 0 : i32
    return %arg0, %c0_i32 : i32, i32
  }
}

module attributes {stable_mosaic.version = 11 : i64} {
  func.func @mlp_kernel(%arg0: i32, %arg1: memref<16x128xbf16, #tpu.memory_space<vmem>>, %arg2: memref<128x128xbf16, #tpu.memory_space<vmem>>, %arg3: memref<1x128xf32, #tpu.memory_space<vmem>>, %arg4: memref<128x128xbf16, #tpu.memory_space<vmem>>, %arg5: memref<1x128xf32, #tpu.memory_space<vmem>>, %arg6: memref<128x128xbf16, #tpu.memory_space<vmem>>, %arg7: memref<1x128xf32, #tpu.memory_space<vmem>>, %arg8: memref<128x128xbf16, #tpu.memory_space<vmem>>, %arg9: memref<1x128xf32, #tpu.memory_space<vmem>>, %arg10: memref<16x128xf32, #tpu.memory_space<vmem>>) attributes {dimension_semantics = [#tpu.dimension_semantics<parallel>], iteration_bounds = array<i64: 1>, scalar_prefetch = 0 : i64, scratch_operands = 0 : i64, tpu.core_type = #tpu.core_type<tc>, window_params = [{transform_indices = @transform_0, window_bounds = array<i64: 16, 128>}, {pipeline_mode = #tpu.pipeline_mode<synchronous>, transform_indices = @transform_1, window_bounds = array<i64: 128, 128>}, {pipeline_mode = #tpu.pipeline_mode<synchronous>, transform_indices = @transform_2, window_bounds = array<i64: 1, 128>}, {pipeline_mode = #tpu.pipeline_mode<synchronous>, transform_indices = @transform_3, window_bounds = array<i64: 128, 128>}, {pipeline_mode = #tpu.pipeline_mode<synchronous>, transform_indices = @transform_4, window_bounds = array<i64: 1, 128>}, {pipeline_mode = #tpu.pipeline_mode<synchronous>, transform_indices = @transform_5, window_bounds = array<i64: 128, 128>}, {pipeline_mode = #tpu.pipeline_mode<synchronous>, transform_indices = @transform_6, window_bounds = array<i64: 1, 128>}, {pipeline_mode = #tpu.pipeline_mode<synchronous>, transform_indices = @transform_7, window_bounds = array<i64: 128, 128>}, {pipeline_mode = #tpu.pipeline_mode<synchronous>, transform_indices = @transform_8, window_bounds = array<i64: 1, 128>}, {transform_indices = @transform_9, window_bounds = array<i64: 16, 128>}]} {
    %c0 = arith.constant 0 : index
    %c0_0 = arith.constant 0 : index
    %0 = vector.load %arg1[%c0, %c0_0] : memref<16x128xbf16, #tpu.memory_space<vmem>>, vector<16x128xbf16>
    %c0_1 = arith.constant 0 : index
    %c0_2 = arith.constant 0 : index
    %1 = vector.load %arg2[%c0_1, %c0_2] : memref<128x128xbf16, #tpu.memory_space<vmem>>, vector<128x128xbf16>
    %cst = arith.constant dense<0.000000e+00> : vector<16x128xf32>
    %2 = tpu.matmul %0, %1, %cst {dimension_numbers = #tpu.dot_dimension_numbers<[1], [0], [0], [1], [0, 0, 1, 1], [], []>} : vector<16x128xbf16>, vector<128x128xbf16>, vector<16x128xf32> -> vector<16x128xf32>
    %c0_3 = arith.constant 0 : index
    %c0_4 = arith.constant 0 : index
    %3 = vector.load %arg3[%c0_3, %c0_4] : memref<1x128xf32, #tpu.memory_space<vmem>>, vector<1x128xf32>
    %4 = vector.broadcast %3 : vector<1x128xf32> to vector<16x128xf32>
    %5 = arith.addf %2, %4 : vector<16x128xf32>
    %cst_5 = arith.constant 0.000000e+00 : f32
    %6 = vector.broadcast %cst_5 : f32 to vector<16x128xf32>
    %7 = arith.maximumf %5, %6 : vector<16x128xf32>
    %8 = arith.truncf %7 : vector<16x128xf32> to vector<16x128xbf16>
    %c0_6 = arith.constant 0 : index
    %c0_7 = arith.constant 0 : index
    %9 = vector.load %arg4[%c0_6, %c0_7] : memref<128x128xbf16, #tpu.memory_space<vmem>>, vector<128x128xbf16>
    %cst_8 = arith.constant dense<0.000000e+00> : vector<16x128xf32>
    %10 = tpu.matmul %8, %9, %cst_8 {dimension_numbers = #tpu.dot_dimension_numbers<[1], [0], [0], [1], [0, 0, 1, 1], [], []>} : vector<16x128xbf16>, vector<128x128xbf16>, vector<16x128xf32> -> vector<16x128xf32>
    %c0_9 = arith.constant 0 : index
    %c0_10 = arith.constant 0 : index
    %11 = vector.load %arg5[%c0_9, %c0_10] : memref<1x128xf32, #tpu.memory_space<vmem>>, vector<1x128xf32>
    %12 = vector.broadcast %11 : vector<1x128xf32> to vector<16x128xf32>
    %13 = arith.addf %10, %12 : vector<16x128xf32>
    %cst_11 = arith.constant 0.000000e+00 : f32
    %14 = vector.broadcast %cst_11 : f32 to vector<16x128xf32>
    %15 = arith.maximumf %13, %14 : vector<16x128xf32>
    %16 = arith.truncf %15 : vector<16x128xf32> to vector<16x128xbf16>
    %c0_12 = arith.constant 0 : index
    %c0_13 = arith.constant 0 : index
    %17 = vector.load %arg6[%c0_12, %c0_13] : memref<128x128xbf16, #tpu.memory_space<vmem>>, vector<128x128xbf16>
    %cst_14 = arith.constant dense<0.000000e+00> : vector<16x128xf32>
    %18 = tpu.matmul %16, %17, %cst_14 {dimension_numbers = #tpu.dot_dimension_numbers<[1], [0], [0], [1], [0, 0, 1, 1], [], []>} : vector<16x128xbf16>, vector<128x128xbf16>, vector<16x128xf32> -> vector<16x128xf32>
    %c0_15 = arith.constant 0 : index
    %c0_16 = arith.constant 0 : index
    %19 = vector.load %arg7[%c0_15, %c0_16] : memref<1x128xf32, #tpu.memory_space<vmem>>, vector<1x128xf32>
    %20 = vector.broadcast %19 : vector<1x128xf32> to vector<16x128xf32>
    %21 = arith.addf %18, %20 : vector<16x128xf32>
    %cst_17 = arith.constant 0.000000e+00 : f32
    %22 = vector.broadcast %cst_17 : f32 to vector<16x128xf32>
    %23 = arith.maximumf %21, %22 : vector<16x128xf32>
    %24 = arith.truncf %23 : vector<16x128xf32> to vector<16x128xbf16>
    %c0_18 = arith.constant 0 : index
    %c0_19 = arith.constant 0 : index
    %25 = vector.load %arg8[%c0_18, %c0_19] : memref<128x128xbf16, #tpu.memory_space<vmem>>, vector<128x128xbf16>
    %cst_20 = arith.constant dense<0.000000e+00> : vector<16x128xf32>
    %26 = tpu.matmul %24, %25, %cst_20 {dimension_numbers = #tpu.dot_dimension_numbers<[1], [0], [0], [1], [0, 0, 1, 1], [], []>} : vector<16x128xbf16>, vector<128x128xbf16>, vector<16x128xf32> -> vector<16x128xf32>
    %c0_21 = arith.constant 0 : index
    %c0_22 = arith.constant 0 : index
    %27 = vector.load %arg9[%c0_21, %c0_22] : memref<1x128xf32, #tpu.memory_space<vmem>>, vector<1x128xf32>
    %28 = vector.broadcast %27 : vector<1x128xf32> to vector<16x128xf32>
    %29 = arith.addf %26, %28 : vector<16x128xf32>
    %c0_23 = arith.constant 0 : index
    %c0_24 = arith.constant 0 : index
    %30 = vector.load %arg10[%c0_23, %c0_24] : memref<16x128xf32, #tpu.memory_space<vmem>>, vector<16x128xf32>
    tpu.vector_store %arg10[%c0_23, %c0_24], %29 {strides = array<i32>} : memref<16x128xf32, #tpu.memory_space<vmem>>, vector<16x128xf32>,
    return
  }
  func.func @transform_0(%arg0: i32) -> (i32, i32) {
    %c0_i32 = arith.constant 0 : i32
    %c0_i32_0 = arith.constant 0 : i32
    return %arg0, %c0_i32 : i32, i32
  }
  func.func @transform_1(%arg0: i32) -> (i32, i32) {
    %c0_i32 = arith.constant 0 : i32
    %c0_i32_0 = arith.constant 0 : i32
    %c0_i32_1 = arith.constant 0 : i32
    return %c0_i32, %c0_i32_0 : i32, i32
  }
  func.func @transform_2(%arg0: i32) -> (i32, i32) {
    %c0_i32 = arith.constant 0 : i32
    %c0_i32_0 = arith.constant 0 : i32
    %c0_i32_1 = arith.constant 0 : i32
    return %c0_i32, %c0_i32_0 : i32, i32
  }
  func.func @transform_3(%arg0: i32) -> (i32, i32) {
    %c0_i32 = arith.constant 0 : i32
    %c0_i32_0 = arith.constant 0 : i32
    %c0_i32_1 = arith.constant 0 : i32
    return %c0_i32, %c0_i32_0 : i32, i32
  }
  func.func @transform_4(%arg0: i32) -> (i32, i32) {
    %c0_i32 = arith.constant 0 : i32
    %c0_i32_0 = arith.constant 0 : i32
    %c0_i32_1 = arith.constant 0 : i32
    return %c0_i32, %c0_i32_0 : i32, i32
  }
  func.func @transform_5(%arg0: i32) -> (i32, i32) {
    %c0_i32 = arith.constant 0 : i32
    %c0_i32_0 = arith.constant 0 : i32
    %c0_i32_1 = arith.constant 0 : i32
    return %c0_i32, %c0_i32_0 : i32, i32
  }
  func.func @transform_6(%arg0: i32) -> (i32, i32) {
    %c0_i32 = arith.constant 0 : i32
    %c0_i32_0 = arith.constant 0 : i32
    %c0_i32_1 = arith.constant 0 : i32
    return %c0_i32, %c0_i32_0 : i32, i32
  }
  func.func @transform_7(%arg0: i32) -> (i32, i32) {
    %c0_i32 = arith.constant 0 : i32
    %c0_i32_0 = arith.constant 0 : i32
    %c0_i32_1 = arith.constant 0 : i32
    return %c0_i32, %c0_i32_0 : i32, i32
  }
  func.func @transform_8(%arg0: i32) -> (i32, i32) {
    %c0_i32 = arith.constant 0 : i32
    %c0_i32_0 = arith.constant 0 : i32
    %c0_i32_1 = arith.constant 0 : i32
    return %c0_i32, %c0_i32_0 : i32, i32
  }
  func.func @transform_9(%arg0: i32) -> (i32, i32) {
    %c0_i32 = arith.constant 0 : i32
    %c0_i32_0 = arith.constant 0 : i32
    return %arg0, %c0_i32 : i32, i32
  }
}

</mosaic_0001>

<llo_original>
// kernel: tpu_custom_call.1
$region0: #{tpu_custom_call.1}
  #allocation0 [shape = 'u32[]', space=smem, size = 0x4, offset = 0x4, fixed_abs, tag = 'smem constant byte address 0x4 - core index']
  #allocation1 [shape = 'u32[144,128]{1,0:T(1,128)}', space=vmem, size = 0x12000, scoped, tag = 'internal scratch']
  %s0 = inlined_call_operand.hbm [shape: bf16[16,128], index: 0, kind: input, shape index: {}]
  %s1 = inlined_call_operand.hbm [shape: bf16[128,128], index: 1, kind: input, shape index: {}]
  %s2 = inlined_call_operand.hbm [shape: f32[1,128], index: 2, kind: input, shape index: {}]
  %s3 = inlined_call_operand.hbm [shape: bf16[128,128], index: 3, kind: input, shape index: {}]
  %s4 = inlined_call_operand.hbm [shape: f32[1,128], index: 4, kind: input, shape index: {}]
  %s5 = inlined_call_operand.hbm [shape: bf16[128,128], index: 5, kind: input, shape index: {}]
  %s6 = inlined_call_operand.hbm [shape: f32[1,128], index: 6, kind: input, shape index: {}]
  %s7 = inlined_call_operand.hbm [shape: bf16[128,128], index: 7, kind: input, shape index: {}]
  %s8 = inlined_call_operand.hbm [shape: f32[1,128], index: 8, kind: input, shape index: {}]
  %s9 = inlined_call_operand.hbm [shape: f32[16,128], index: 9, kind: output, shape index: {}]
  %s10 = sld [smem:[#allocation0]]
  $region82: #{tpu_custom_call.1} parent=0
    _
  %s12 = ssub.s32 1, %s10
  %s13 = scalar_select 0, %s12, %s10
  $region1: #{tpu_custom_call.1} parent=0
    #allocation2 [shape = 'u8[4096]{0}', space=vmem, size = 0x1000, scoped, tag = 'input window, operand 0, single buffered']
    #allocation3 [shape = 's32[1]{0}', space=sflag, size = 0x4, scoped, tag = 'scoped memory for tpu_custom_call.1']
    #allocation4 [shape = 's32[1]{0}', space=sflag, size = 0x4, scoped, tag = 'scoped memory for tpu_custom_call.1']
    #allocation5 [shape = 'u8[32768]{0}', space=vmem, size = 0x8000, scoped, tag = 'input window, operand 1, single buffered']
    #allocation6 [shape = 's32[1]{0}', space=sflag, size = 0x4, scoped, tag = 'scoped memory for tpu_custom_call.1']
    #allocation7 [shape = 'u8[512]{0}', space=vmem, size = 0x400, scoped, tag = 'input window, operand 2, single buffered']
    #allocation8 [shape = 'u8[32768]{0}', space=vmem, size = 0x8000, scoped, tag = 'input window, operand 3, single buffered']
    #allocation9 [shape = 's32[1]{0}', space=sflag, size = 0x4, scoped, tag = 'scoped memory for tpu_custom_call.1']
    #allocation10 [shape = 'u8[512]{0}', space=vmem, size = 0x400, scoped, tag = 'input window, operand 4, single buffered']
    #allocation11 [shape = 'u8[32768]{0}', space=vmem, size = 0x8000, scoped, tag = 'input window, operand 5, single buffered']
    #allocation12 [shape = 's32[1]{0}', space=sflag, size = 0x4, scoped, tag = 'scoped memory for tpu_custom_call.1']
    #allocation13 [shape = 'u8[512]{0}', space=vmem, size = 0x400, scoped, tag = 'input window, operand 6, single buffered']
    #allocation14 [shape = 'u8[32768]{0}', space=vmem, size = 0x8000, scoped, tag = 'input window, operand 7, single buffered']
    #allocation15 [shape = 's32[1]{0}', space=sflag, size = 0x4, scoped, tag = 'scoped memory for tpu_custom_call.1']
    #allocation16 [shape = 'u8[512]{0}', space=vmem, size = 0x400, scoped, tag = 'input window, operand 8, single buffered']
    #allocation17 [shape = 'u8[8192]{0}', space=vmem, size = 0x2000, scoped, tag = 'output window, operand 0, single buffered']
    %14 = vsyncpa [#allocation3], 0
    %15 = vsyncpa [#allocation6], 0
    %16 = vsyncpa [#allocation9], 0
    %17 = vsyncpa [#allocation12], 0
    %18 = vsyncpa [#allocation15], 0
    %19 = vsyncpa [#allocation4], 0
    // Predicated region
    $region2: #{tpu_custom_call.1} parent=1 // pred_check
      _
    $region3: #{tpu_custom_call.1} parent=1 // pred_check_branch
      %21 = sbr.rel (0) target = $region5
    $region4: #{tpu_custom_call.1} parent=1 // pred_region
      %s23 = ssub.s32 128, 128
      %24 = vsyncadd [#allocation3], %s23
      %s25 = sshll.u32 [#allocation2], 4
      %s26 = int_to_ptr.vmem [resolvable:$true] %s25
      %31 = dma.hbm_to_vmem [thread:$0]  %s0, 128, %s26, [#allocation3], 64, 64, 4
    $region5: #{tpu_custom_call.1} parent=1 // pred_fallthru
      _
    // Predicated region
    $region6: #{tpu_custom_call.1} parent=1 // pred_check
      _
    $region7: #{tpu_custom_call.1} parent=1 // pred_check_branch
      %33 = sbr.rel (0) target = $region9
    $region8: #{tpu_custom_call.1} parent=1 // pred_region
      %s35 = ssub.s32 1024, 1024
      %36 = vsyncadd [#allocation6], %s35
      %s37 = sshll.u32 [#allocation5], 4
      %s38 = int_to_ptr.vmem [resolvable:$true] %s37
      %43 = dma.hbm_to_vmem [thread:$0]  %s1, 1024, %s38, [#allocation6], 64, 64, 4
    $region9: #{tpu_custom_call.1} parent=1 // pred_fallthru
      _
    // Predicated region
    $region10: #{tpu_custom_call.1} parent=1 // pred_check
      _
    $region11: #{tpu_custom_call.1} parent=1 // pred_check_branch
      %45 = sbr.rel (0) target = $region13
    $region12: #{tpu_custom_call.1} parent=1 // pred_region
      %s47 = ssub.s32 16, 16
      %48 = vsyncadd [#allocation6], %s47
      %s50 = sshll.u32 [#allocation7], 4
      %s51 = int_to_ptr.vmem [resolvable:$true] %s50
      %53 = dma.hbm_to_vmem [thread:$0]  %s2, 16, %s51, [#allocation6]
    $region13: #{tpu_custom_call.1} parent=1 // pred_fallthru
      _
    // Predicated region
    $region14: #{tpu_custom_call.1} parent=1 // pred_check
      _
    $region15: #{tpu_custom_call.1} parent=1 // pred_check_branch
      %55 = sbr.rel (0) target = $region17
    $region16: #{tpu_custom_call.1} parent=1 // pred_region
      %s57 = ssub.s32 1024, 1024
      %58 = vsyncadd [#allocation9], %s57
      %s59 = sshll.u32 [#allocation8], 4
      %s60 = int_to_ptr.vmem [resolvable:$true] %s59
      %65 = dma.hbm_to_vmem [thread:$0]  %s3, 1024, %s60, [#allocation9], 64, 64, 4
    $region17: #{tpu_custom_call.1} parent=1 // pred_fallthru
      _
    // Predicated region
    $region18: #{tpu_custom_call.1} parent=1 // pred_check
      _
    $region19: #{tpu_custom_call.1} parent=1 // pred_check_branch
      %67 = sbr.rel (0) target = $region21
    $region20: #{tpu_custom_call.1} parent=1 // pred_region
      %s69 = ssub.s32 16, 16
      %70 = vsyncadd [#allocation9], %s69
      %s72 = sshll.u32 [#allocation10], 4
      %s73 = int_to_ptr.vmem [resolvable:$true] %s72
      %75 = dma.hbm_to_vmem [thread:$0]  %s4, 16, %s73, [#allocation9]
    $region21: #{tpu_custom_call.1} parent=1 // pred_fallthru
      _
    // Predicated region
    $region22: #{tpu_custom_call.1} parent=1 // pred_check
      _
    $region23: #{tpu_custom_call.1} parent=1 // pred_check_branch
      %77 = sbr.rel (0) target = $region25
    $region24: #{tpu_custom_call.1} parent=1 // pred_region
      %s79 = ssub.s32 1024, 1024
      %80 = vsyncadd [#allocation12], %s79
      %s81 = sshll.u32 [#allocation11], 4
      %s82 = int_to_ptr.vmem [resolvable:$true] %s81
      %87 = dma.hbm_to_vmem [thread:$0]  %s5, 1024, %s82, [#allocation12], 64, 64, 4
    $region25: #{tpu_custom_call.1} parent=1 // pred_fallthru
      _
    // Predicated region
    $region26: #{tpu_custom_call.1} parent=1 // pred_check
      _
    $region27: #{tpu_custom_call.1} parent=1 // pred_check_branch
      %89 = sbr.rel (0) target = $region29
    $region28: #{tpu_custom_call.1} parent=1 // pred_region
      %s91 = ssub.s32 16, 16
      %92 = vsyncadd [#allocation12], %s91
      %s94 = sshll.u32 [#allocation13], 4
      %s95 = int_to_ptr.vmem [resolvable:$true] %s94
      %97 = dma.hbm_to_vmem [thread:$0]  %s6, 16, %s95, [#allocation12]
    $region29: #{tpu_custom_call.1} parent=1 // pred_fallthru
      _
    // Predicated region
    $region30: #{tpu_custom_call.1} parent=1 // pred_check
      _
    $region31: #{tpu_custom_call.1} parent=1 // pred_check_branch
      %99 = sbr.rel (0) target = $region33
    $region32: #{tpu_custom_call.1} parent=1 // pred_region
      %s101 = ssub.s32 1024, 1024
      %102 = vsyncadd [#allocation15], %s101
      %s103 = sshll.u32 [#allocation14], 4
      %s104 = int_to_ptr.vmem [resolvable:$true] %s103
      %109 = dma.hbm_to_vmem [thread:$0]  %s7, 1024, %s104, [#allocation15], 64, 64, 4
    $region33: #{tpu_custom_call.1} parent=1 // pred_fallthru
      _
    // Predicated region
    $region34: #{tpu_custom_call.1} parent=1 // pred_check
      _
    $region35: #{tpu_custom_call.1} parent=1 // pred_check_branch
      %111 = sbr.rel (0) target = $region37
    $region36: #{tpu_custom_call.1} parent=1 // pred_region
      %s113 = ssub.s32 16, 16
      %114 = vsyncadd [#allocation15], %s113
      %s116 = sshll.u32 [#allocation16], 4
      %s117 = int_to_ptr.vmem [resolvable:$true] %s116
      %119 = dma.hbm_to_vmem [thread:$0]  %s8, 16, %s117, [#allocation15]
    $region37: #{tpu_custom_call.1} parent=1 // pred_fallthru
      _
    // Predicated region
    $region38: #{tpu_custom_call.1} parent=1 // pred_check
      _
    $region39: #{tpu_custom_call.1} parent=1 // pred_check_branch
      %121 = sbr.rel (0) target = $region41
    $region40: #{tpu_custom_call.1} parent=1 // pred_region
      %122 = dma.done [#allocation3], 128
    $region41: #{tpu_custom_call.1} parent=1 // pred_fallthru
      _
    // Predicated region
    $region42: #{tpu_custom_call.1} parent=1 // pred_check
      _
    $region43: #{tpu_custom_call.1} parent=1 // pred_check_branch
      %124 = sbr.rel (0) target = $region45
    $region44: #{tpu_custom_call.1} parent=1 // pred_region
      %125 = dma.done [#allocation6], 1024
    $region45: #{tpu_custom_call.1} parent=1 // pred_fallthru
      _
    // Predicated region
    $region46: #{tpu_custom_call.1} parent=1 // pred_check
      _
    $region47: #{tpu_custom_call.1} parent=1 // pred_check_branch
      %127 = sbr.rel (0) target = $region49
    $region48: #{tpu_custom_call.1} parent=1 // pred_region
      %128 = dma.done [#allocation6], 16
    $region49: #{tpu_custom_call.1} parent=1 // pred_fallthru
      _
    // Predicated region
    $region50: #{tpu_custom_call.1} parent=1 // pred_check
      _
    $region51: #{tpu_custom_call.1} parent=1 // pred_check_branch
      %130 = sbr.rel (0) target = $region53
    $region52: #{tpu_custom_call.1} parent=1 // pred_region
      %131 = dma.done [#allocation9], 1024
    $region53: #{tpu_custom_call.1} parent=1 // pred_fallthru
      _
    // Predicated region
    $region54: #{tpu_custom_call.1} parent=1 // pred_check
      _
    $region55: #{tpu_custom_call.1} parent=1 // pred_check_branch
      %133 = sbr.rel (0) target = $region57
    $region56: #{tpu_custom_call.1} parent=1 // pred_region
      %134 = dma.done [#allocation9], 16
    $region57: #{tpu_custom_call.1} parent=1 // pred_fallthru
      _
    // Predicated region
    $region58: #{tpu_custom_call.1} parent=1 // pred_check
      _
    $region59: #{tpu_custom_call.1} parent=1 // pred_check_branch
      %136 = sbr.rel (0) target = $region61
    $region60: #{tpu_custom_call.1} parent=1 // pred_region
      %137 = dma.done [#allocation12], 1024
    $region61: #{tpu_custom_call.1} parent=1 // pred_fallthru
      _
    // Predicated region
    $region62: #{tpu_custom_call.1} parent=1 // pred_check
      _
    $region63: #{tpu_custom_call.1} parent=1 // pred_check_branch
      %139 = sbr.rel (0) target = $region65
    $region64: #{tpu_custom_call.1} parent=1 // pred_region
      %140 = dma.done [#allocation12], 16
    $region65: #{tpu_custom_call.1} parent=1 // pred_fallthru
      _
    // Predicated region
    $region66: #{tpu_custom_call.1} parent=1 // pred_check
      _
    $region67: #{tpu_custom_call.1} parent=1 // pred_check_branch
      %142 = sbr.rel (0) target = $region69
    $region68: #{tpu_custom_call.1} parent=1 // pred_region
      %143 = dma.done [#allocation15], 1024
    $region69: #{tpu_custom_call.1} parent=1 // pred_fallthru
      _
    // Predicated region
    $region70: #{tpu_custom_call.1} parent=1 // pred_check
      _
    $region71: #{tpu_custom_call.1} parent=1 // pred_check_branch
      %145 = sbr.rel (0) target = $region73
    $region72: #{tpu_custom_call.1} parent=1 // pred_region
      %146 = dma.done [#allocation15], 16
    $region73: #{tpu_custom_call.1} parent=1 // pred_fallthru
      _
    %v148 = vld [vmem:[#allocation2] sm:$0xf]
    %v149 = vld [vmem:[#allocation2 + $0x4] sm:$0xf]
    %v150 = vld [vmem:[#allocation5] sm:$0xf]
    %v151 = vld [vmem:[#allocation5 + $0x4] sm:$0xf]
    %v152 = vld [vmem:[#allocation5 + $0x8] sm:$0xf]
    %v153 = vld [vmem:[#allocation5 + $0xc] sm:$0xf]
    %v154 = vld [vmem:[#allocation5 + $0x10] sm:$0xf]
    %v155 = vld [vmem:[#allocation5 + $0x14] sm:$0xf]
    %v156 = vld [vmem:[#allocation5 + $0x18] sm:$0xf]
    %v157 = vld [vmem:[#allocation5 + $0x1c] sm:$0xf]
    %v158 = vld [vmem:[#allocation5 + $0x20] sm:$0xf]
    %v159 = vld [vmem:[#allocation5 + $0x24] sm:$0xf]
    %v160 = vld [vmem:[#allocation5 + $0x28] sm:$0xf]
    %v161 = vld [vmem:[#allocation5 + $0x2c] sm:$0xf]
    %v162 = vld [vmem:[#allocation5 + $0x30] sm:$0xf]
    %v163 = vld [vmem:[#allocation5 + $0x34] sm:$0xf]
    %v164 = vld [vmem:[#allocation5 + $0x38] sm:$0xf]
    %v165 = vld [vmem:[#allocation5 + $0x3c] sm:$0xf]
    %v166 = vld [vmem:[#allocation7] sm:$0x1]
    %v168 = vlaneseq
    %v169 = vshrl.u32 %v168, 7
    %v170 = vsub.s32 0, %v169
    %v171 = vrot.slane %v166, %v170
    %v175 = vunpack.c.l.b16 %v148
    %v176 = vunpack.c.l.b16 %v149
    %v177 = vpack.c.b16 %v176, %v175
    %v195 = vunpack.c.l.b16 %v150
    %v196 = vunpack.c.l.b16 %v151
    %v197 = vunpack.c.l.b16 %v152
    %v198 = vunpack.c.l.b16 %v153
    %v199 = vunpack.c.l.b16 %v154
    %v200 = vunpack.c.l.b16 %v155
    %v201 = vunpack.c.l.b16 %v156
    %v202 = vunpack.c.l.b16 %v157
    %v203 = vunpack.c.l.b16 %v158
    %v204 = vunpack.c.l.b16 %v159
    %v205 = vunpack.c.l.b16 %v160
    %v206 = vunpack.c.l.b16 %v161
    %v207 = vunpack.c.l.b16 %v162
    %v208 = vunpack.c.l.b16 %v163
    %v209 = vunpack.c.l.b16 %v164
    %v210 = vunpack.c.l.b16 %v165
    %v211 = vpack.c.b16 %v196, %v195
    %v212 = vpack.c.b16 %v198, %v197
    %v213 = vpack.c.b16 %v200, %v199
    %v214 = vpack.c.b16 %v202, %v201
    %v215 = vpack.c.b16 %v204, %v203
    %v216 = vpack.c.b16 %v206, %v205
    %v217 = vpack.c.b16 %v208, %v207
    %v218 = vpack.c.b16 %v210, %v209
    %227 = vmatprep.subr.bf16.mxu0 0
    %228 = vmatpush1.bf16.msra.mxu0 %v211
    %229 = vmatprep.subr.bf16.mxu0 0
    %230 = vmatpush1.bf16.msra.mxu0 %v212
    %231 = vmatprep.subr.bf16.mxu0 0
    %232 = vmatpush1.bf16.msra.mxu0 %v213
    %233 = vmatprep.subr.bf16.mxu0 0
    %234 = vmatpush1.bf16.msra.mxu0 %v214
    %235 = vmatprep.subr.bf16.mxu0 0
    %236 = vmatpush1.bf16.msra.mxu0 %v215
    %237 = vmatprep.subr.bf16.mxu0 0
    %238 = vmatpush1.bf16.msra.mxu0 %v216
    %239 = vmatprep.subr.bf16.mxu0 0
    %240 = vmatpush1.bf16.msra.mxu0 %v217
    %241 = vmatprep.subr.bf16.mxu0 0
    %242 = vmatpush1.bf16.msra.mxu0 %v218
    %243 = vmatprep.subr.bf16.mxu0 0
    %244 = vmatpush1.bf16.msra.mxu0 0
    %245 = vmatprep.subr.bf16.mxu0 0
    %246 = vmatpush1.bf16.msra.mxu0 0
    %247 = vmatprep.subr.bf16.mxu0 0
    %248 = vmatpush1.bf16.msra.mxu0 0
    %249 = vmatprep.subr.bf16.mxu0 0
    %250 = vmatpush1.bf16.msra.mxu0 0
    %251 = vmatprep.subr.bf16.mxu0 0
    %252 = vmatpush1.bf16.msra.mxu0 0
    %253 = vmatprep.subr.bf16.mxu0 0
    %254 = vmatpush1.bf16.msra.mxu0 0
    %255 = vmatprep.subr.bf16.mxu0 0
    %256 = vmatpush1.bf16.msra.mxu0 0
    %257 = vmatprep.subr.bf16.mxu0 0
    %258 = vmatpush1.bf16.msra.mxu0 0
    %259 = vmatprep.mubr.bf16.mxu0 0
    %260 = vmatmul.mubr.bf16.gmra.mrb[0].mxu0 %v177
    %v261 = vpop.f32.mrb[0].mxu0
    %v262 = vadd.f32 %v171, %v261
    %v263 = vpop.f32.mrb[0].mxu0
    %v264 = vpop.f32.mrb[0].mxu0
    %v265 = vadd.f32 %v171, %v264
    %v266 = vpop.f32.mrb[0].mxu0
    %267 = vdwg.mxu0
    %v268 = vmax.f32 %v262, 0.0
    %v269 = vmax.f32 %v265, 0.0
    %v270 = vpack.c.bf16 %v269, %v268
    %v271 = vld [vmem:[#allocation8] sm:$0xf]
    %v272 = vld [vmem:[#allocation8 + $0x4] sm:$0xf]
    %v273 = vld [vmem:[#allocation8 + $0x8] sm:$0xf]
    %v274 = vld [vmem:[#allocation8 + $0xc] sm:$0xf]
    %v275 = vld [vmem:[#allocation8 + $0x10] sm:$0xf]
    %v276 = vld [vmem:[#allocation8 + $0x14] sm:$0xf]
    %v277 = vld [vmem:[#allocation8 + $0x18] sm:$0xf]
    %v278 = vld [vmem:[#allocation8 + $0x1c] sm:$0xf]
    %v279 = vld [vmem:[#allocation8 + $0x20] sm:$0xf]
    %v280 = vld [vmem:[#allocation8 + $0x24] sm:$0xf]
    %v281 = vld [vmem:[#allocation8 + $0x28] sm:$0xf]
    %v282 = vld [vmem:[#allocation8 + $0x2c] sm:$0xf]
    %v283 = vld [vmem:[#allocation8 + $0x30] sm:$0xf]
    %v284 = vld [vmem:[#allocation8 + $0x34] sm:$0xf]
    %v285 = vld [vmem:[#allocation8 + $0x38] sm:$0xf]
    %v286 = vld [vmem:[#allocation8 + $0x3c] sm:$0xf]
    %v287 = vld [vmem:[#allocation10] sm:$0x1]
    %v289 = vlaneseq
    %v290 = vshrl.u32 %v289, 7
    %v291 = vsub.s32 0, %v290
    %v292 = vrot.slane %v287, %v291
    %v310 = vunpack.c.l.b16 %v271
    %v311 = vunpack.c.l.b16 %v272
    %v312 = vunpack.c.l.b16 %v273
    %v313 = vunpack.c.l.b16 %v274
    %v314 = vunpack.c.l.b16 %v275
    %v315 = vunpack.c.l.b16 %v276
    %v316 = vunpack.c.l.b16 %v277
    %v317 = vunpack.c.l.b16 %v278
    %v318 = vunpack.c.l.b16 %v279
    %v319 = vunpack.c.l.b16 %v280
    %v320 = vunpack.c.l.b16 %v281
    %v321 = vunpack.c.l.b16 %v282
    %v322 = vunpack.c.l.b16 %v283
    %v323 = vunpack.c.l.b16 %v284
    %v324 = vunpack.c.l.b16 %v285
    %v325 = vunpack.c.l.b16 %v286
    %v326 = vpack.c.b16 %v311, %v310
    %v327 = vpack.c.b16 %v313, %v312
    %v328 = vpack.c.b16 %v315, %v314
    %v329 = vpack.c.b16 %v317, %v316
    %v330 = vpack.c.b16 %v319, %v318
    %v331 = vpack.c.b16 %v321, %v320
    %v332 = vpack.c.b16 %v323, %v322
    %v333 = vpack.c.b16 %v325, %v324
    %342 = vmatprep.subr.bf16.mxu0 0
    %343 = vmatpush1.bf16.msra.mxu0 %v326
    %344 = vmatprep.subr.bf16.mxu0 0
    %345 = vmatpush1.bf16.msra.mxu0 %v327
    %346 = vmatprep.subr.bf16.mxu0 0
    %347 = vmatpush1.bf16.msra.mxu0 %v328
    %348 = vmatprep.subr.bf16.mxu0 0
    %349 = vmatpush1.bf16.msra.mxu0 %v329
    %350 = vmatprep.subr.bf16.mxu0 0
    %351 = vmatpush1.bf16.msra.mxu0 %v330
    %352 = vmatprep.subr.bf16.mxu0 0
    %353 = vmatpush1.bf16.msra.mxu0 %v331
    %354 = vmatprep.subr.bf16.mxu0 0
    %355 = vmatpush1.bf16.msra.mxu0 %v332
    %356 = vmatprep.subr.bf16.mxu0 0
    %357 = vmatpush1.bf16.msra.mxu0 %v333
    %358 = vmatprep.subr.bf16.mxu0 0
    %359 = vmatpush1.bf16.msra.mxu0 0
    %360 = vmatprep.subr.bf16.mxu0 0
    %361 = vmatpush1.bf16.msra.mxu0 0
    %362 = vmatprep.subr.bf16.mxu0 0
    %363 = vmatpush1.bf16.msra.mxu0 0
    %364 = vmatprep.subr.bf16.mxu0 0
    %365 = vmatpush1.bf16.msra.mxu0 0
    %366 = vmatprep.subr.bf16.mxu0 0
    %367 = vmatpush1.bf16.msra.mxu0 0
    %368 = vmatprep.subr.bf16.mxu0 0
    %369 = vmatpush1.bf16.msra.mxu0 0
    %370 = vmatprep.subr.bf16.mxu0 0
    %371 = vmatpush1.bf16.msra.mxu0 0
    %372 = vmatprep.subr.bf16.mxu0 0
    %373 = vmatpush1.bf16.msra.mxu0 0
    %374 = vmatprep.mubr.bf16.mxu0 0
    %375 = vmatmul.mubr.bf16.gmra.mrb[0].mxu0 %v270
    %v376 = vpop.f32.mrb[0].mxu0
    %v377 = vadd.f32 %v292, %v376
    %v378 = vpop.f32.mrb[0].mxu0
    %v379 = vpop.f32.mrb[0].mxu0
    %v380 = vadd.f32 %v292, %v379
    %v381 = vpop.f32.mrb[0].mxu0
    %382 = vdwg.mxu0
    %v383 = vmax.f32 %v377, 0.0
    %v384 = vmax.f32 %v380, 0.0
    %v385 = vpack.c.bf16 %v384, %v383
    %v386 = vld [vmem:[#allocation11] sm:$0xf]
    %v387 = vld [vmem:[#allocation11 + $0x4] sm:$0xf]
    %v388 = vld [vmem:[#allocation11 + $0x8] sm:$0xf]
    %v389 = vld [vmem:[#allocation11 + $0xc] sm:$0xf]
    %v390 = vld [vmem:[#allocation11 + $0x10] sm:$0xf]
    %v391 = vld [vmem:[#allocation11 + $0x14] sm:$0xf]
    %v392 = vld [vmem:[#allocation11 + $0x18] sm:$0xf]
    %v393 = vld [vmem:[#allocation11 + $0x1c] sm:$0xf]
    %v394 = vld [vmem:[#allocation11 + $0x20] sm:$0xf]
    %v395 = vld [vmem:[#allocation11 + $0x24] sm:$0xf]
    %v396 = vld [vmem:[#allocation11 + $0x28] sm:$0xf]
    %v397 = vld [vmem:[#allocation11 + $0x2c] sm:$0xf]
    %v398 = vld [vmem:[#allocation11 + $0x30] sm:$0xf]
    %v399 = vld [vmem:[#allocation11 + $0x34] sm:$0xf]
    %v400 = vld [vmem:[#allocation11 + $0x38] sm:$0xf]
    %v401 = vld [vmem:[#allocation11 + $0x3c] sm:$0xf]
    %v402 = vld [vmem:[#allocation13] sm:$0x1]
    %v404 = vlaneseq
    %v405 = vshrl.u32 %v404, 7
    %v406 = vsub.s32 0, %v405
    %v407 = vrot.slane %v402, %v406
    %v425 = vunpack.c.l.b16 %v386
    %v426 = vunpack.c.l.b16 %v387
    %v427 = vunpack.c.l.b16 %v388
    %v428 = vunpack.c.l.b16 %v389
    %v429 = vunpack.c.l.b16 %v390
    %v430 = vunpack.c.l.b16 %v391
    %v431 = vunpack.c.l.b16 %v392
    %v432 = vunpack.c.l.b16 %v393
    %v433 = vunpack.c.l.b16 %v394
    %v434 = vunpack.c.l.b16 %v395
    %v435 = vunpack.c.l.b16 %v396
    %v436 = vunpack.c.l.b16 %v397
    %v437 = vunpack.c.l.b16 %v398
    %v438 = vunpack.c.l.b16 %v399
    %v439 = vunpack.c.l.b16 %v400
    %v440 = vunpack.c.l.b16 %v401
    %v441 = vpack.c.b16 %v426, %v425
    %v442 = vpack.c.b16 %v428, %v427
    %v443 = vpack.c.b16 %v430, %v429
    %v444 = vpack.c.b16 %v432, %v431
    %v445 = vpack.c.b16 %v434, %v433
    %v446 = vpack.c.b16 %v436, %v435
    %v447 = vpack.c.b16 %v438, %v437
    %v448 = vpack.c.b16 %v440, %v439
    %457 = vmatprep.subr.bf16.mxu0 0
    %458 = vmatpush1.bf16.msra.mxu0 %v441
    %459 = vmatprep.subr.bf16.mxu0 0
    %460 = vmatpush1.bf16.msra.mxu0 %v442
    %461 = vmatprep.subr.bf16.mxu0 0
    %462 = vmatpush1.bf16.msra.mxu0 %v443
    %463 = vmatprep.subr.bf16.mxu0 0
    %464 = vmatpush1.bf16.msra.mxu0 %v444
    %465 = vmatprep.subr.bf16.mxu0 0
    %466 = vmatpush1.bf16.msra.mxu0 %v445
    %467 = vmatprep.subr.bf16.mxu0 0
    %468 = vmatpush1.bf16.msra.mxu0 %v446
    %469 = vmatprep.subr.bf16.mxu0 0
    %470 = vmatpush1.bf16.msra.mxu0 %v447
    %471 = vmatprep.subr.bf16.mxu0 0
    %472 = vmatpush1.bf16.msra.mxu0 %v448
    %473 = vmatprep.subr.bf16.mxu0 0
    %474 = vmatpush1.bf16.msra.mxu0 0
    %475 = vmatprep.subr.bf16.mxu0 0
    %476 = vmatpush1.bf16.msra.mxu0 0
    %477 = vmatprep.subr.bf16.mxu0 0
    %478 = vmatpush1.bf16.msra.mxu0 0
    %479 = vmatprep.subr.bf16.mxu0 0
    %480 = vmatpush1.bf16.msra.mxu0 0
    %481 = vmatprep.subr.bf16.mxu0 0
    %482 = vmatpush1.bf16.msra.mxu0 0
    %483 = vmatprep.subr.bf16.mxu0 0
    %484 = vmatpush1.bf16.msra.mxu0 0
    %485 = vmatprep.subr.bf16.mxu0 0
    %486 = vmatpush1.bf16.msra.mxu0 0
    %487 = vmatprep.subr.bf16.mxu0 0
    %488 = vmatpush1.bf16.msra.mxu0 0
    %489 = vmatprep.mubr.bf16.mxu0 0
    %490 = vmatmul.mubr.bf16.gmra.mrb[0].mxu0 %v385
    %v491 = vpop.f32.mrb[0].mxu0
    %v492 = vadd.f32 %v407, %v491
    %v493 = vpop.f32.mrb[0].mxu0
    %v494 = vpop.f32.mrb[0].mxu0
    %v495 = vadd.f32 %v407, %v494
    %v496 = vpop.f32.mrb[0].mxu0
    %497 = vdwg.mxu0
    %v498 = vmax.f32 %v492, 0.0
    %v499 = vmax.f32 %v495, 0.0
    %v500 = vpack.c.bf16 %v499, %v498
    %v501 = vld [vmem:[#allocation14] sm:$0xf]
    %v502 = vld [vmem:[#allocation14 + $0x4] sm:$0xf]
    %v503 = vld [vmem:[#allocation14 + $0x8] sm:$0xf]
    %v504 = vld [vmem:[#allocation14 + $0xc] sm:$0xf]
    %v505 = vld [vmem:[#allocation14 + $0x10] sm:$0xf]
    %v506 = vld [vmem:[#allocation14 + $0x14] sm:$0xf]
    %v507 = vld [vmem:[#allocation14 + $0x18] sm:$0xf]
    %v508 = vld [vmem:[#allocation14 + $0x1c] sm:$0xf]
    %v509 = vld [vmem:[#allocation14 + $0x20] sm:$0xf]
    %v510 = vld [vmem:[#allocation14 + $0x24] sm:$0xf]
    %v511 = vld [vmem:[#allocation14 + $0x28] sm:$0xf]
    %v512 = vld [vmem:[#allocation14 + $0x2c] sm:$0xf]
    %v513 = vld [vmem:[#allocation14 + $0x30] sm:$0xf]
    %v514 = vld [vmem:[#allocation14 + $0x34] sm:$0xf]
    %v515 = vld [vmem:[#allocation14 + $0x38] sm:$0xf]
    %v516 = vld [vmem:[#allocation14 + $0x3c] sm:$0xf]
    %v517 = vld [vmem:[#allocation16] sm:$0x1]
    %v519 = vlaneseq
    %v520 = vshrl.u32 %v519, 7
    %v521 = vsub.s32 0, %v520
    %v522 = vrot.slane %v517, %v521
    %v540 = vunpack.c.l.b16 %v501
    %v541 = vunpack.c.l.b16 %v502
    %v542 = vunpack.c.l.b16 %v503
    %v543 = vunpack.c.l.b16 %v504
    %v544 = vunpack.c.l.b16 %v505
    %v545 = vunpack.c.l.b16 %v506
    %v546 = vunpack.c.l.b16 %v507
    %v547 = vunpack.c.l.b16 %v508
    %v548 = vunpack.c.l.b16 %v509
    %v549 = vunpack.c.l.b16 %v510
    %v550 = vunpack.c.l.b16 %v511
    %v551 = vunpack.c.l.b16 %v512
    %v552 = vunpack.c.l.b16 %v513
    %v553 = vunpack.c.l.b16 %v514
    %v554 = vunpack.c.l.b16 %v515
    %v555 = vunpack.c.l.b16 %v516
    %v556 = vpack.c.b16 %v541, %v540
    %v557 = vpack.c.b16 %v543, %v542
    %v558 = vpack.c.b16 %v545, %v544
    %v559 = vpack.c.b16 %v547, %v546
    %v560 = vpack.c.b16 %v549, %v548
    %v561 = vpack.c.b16 %v551, %v550
    %v562 = vpack.c.b16 %v553, %v552
    %v563 = vpack.c.b16 %v555, %v554
    %572 = vmatprep.subr.bf16.mxu0 0
    %573 = vmatpush1.bf16.msra.mxu0 %v556
    %574 = vmatprep.subr.bf16.mxu0 0
    %575 = vmatpush1.bf16.msra.mxu0 %v557
    %576 = vmatprep.subr.bf16.mxu0 0
    %577 = vmatpush1.bf16.msra.mxu0 %v558
    %578 = vmatprep.subr.bf16.mxu0 0
    %579 = vmatpush1.bf16.msra.mxu0 %v559
    %580 = vmatprep.subr.bf16.mxu0 0
    %581 = vmatpush1.bf16.msra.mxu0 %v560
    %582 = vmatprep.subr.bf16.mxu0 0
    %583 = vmatpush1.bf16.msra.mxu0 %v561
    %584 = vmatprep.subr.bf16.mxu0 0
    %585 = vmatpush1.bf16.msra.mxu0 %v562
    %586 = vmatprep.subr.bf16.mxu0 0
    %587 = vmatpush1.bf16.msra.mxu0 %v563
    %588 = vmatprep.subr.bf16.mxu0 0
    %589 = vmatpush1.bf16.msra.mxu0 0
    %590 = vmatprep.subr.bf16.mxu0 0
    %591 = vmatpush1.bf16.msra.mxu0 0
    %592 = vmatprep.subr.bf16.mxu0 0
    %593 = vmatpush1.bf16.msra.mxu0 0
    %594 = vmatprep.subr.bf16.mxu0 0
    %595 = vmatpush1.bf16.msra.mxu0 0
    %596 = vmatprep.subr.bf16.mxu0 0
    %597 = vmatpush1.bf16.msra.mxu0 0
    %598 = vmatprep.subr.bf16.mxu0 0
    %599 = vmatpush1.bf16.msra.mxu0 0
    %600 = vmatprep.subr.bf16.mxu0 0
    %601 = vmatpush1.bf16.msra.mxu0 0
    %602 = vmatprep.subr.bf16.mxu0 0
    %603 = vmatpush1.bf16.msra.mxu0 0
    %604 = vmatprep.mubr.bf16.mxu0 0
    %605 = vmatmul.mubr.bf16.gmra.mrb[0].mxu0 %v500
    %v606 = vpop.f32.mrb[0].mxu0
    %v607 = vadd.f32 %v522, %v606
    %v608 = vpop.f32.mrb[0].mxu0
    %v609 = vpop.f32.mrb[0].mxu0
    %v610 = vadd.f32 %v522, %v609
    %v611 = vpop.f32.mrb[0].mxu0
    %612 = vdwg.mxu0
    %613 = vst [vmem:[#allocation17] sm:$0xff] %v607
    %614 = vst [vmem:[#allocation17 + $0x8] sm:$0xff] %v610
    // Predicated region
    $region74: #{tpu_custom_call.1} parent=1 // pred_check
      _
    $region75: #{tpu_custom_call.1} parent=1 // pred_check_branch
      %616 = sbr.rel (0) target = $region77
    $region76: #{tpu_custom_call.1} parent=1 // pred_region
      %s618 = ssub.s32 256, 256
      %619 = vsyncadd [#allocation4], %s618
      %s620 = sshll.u32 [#allocation17], 4
      %s621 = int_to_ptr.vmem [resolvable:$true] %s620
      %626 = dma.vmem_to_hbm [thread:$0]  %s621, 256, %s9, [#allocation4], 128, 128, 8
    $region77: #{tpu_custom_call.1} parent=1 // pred_fallthru
      _
    // Predicated region
    $region78: #{tpu_custom_call.1} parent=1 // pred_check
      _
    $region79: #{tpu_custom_call.1} parent=1 // pred_check_branch
      %628 = sbr.rel (0) target = $region81
    $region80: #{tpu_custom_call.1} parent=1 // pred_region
      %629 = dma.done [#allocation4], 256
    $region81: #{tpu_custom_call.1} parent=1 // pred_fallthru
      _
    %630 = vsyncpa [#allocation3], 1
    %631 = vsyncpa [#allocation6], 1
    %632 = vsyncpa [#allocation9], 1
    %633 = vsyncpa [#allocation12], 1
    %634 = vsyncpa [#allocation15], 1
    %635 = vsyncpa [#allocation4], 1

// kernel: tpu_custom_call.1
$region0: #{tpu_custom_call.1}
  #allocation0 [shape = 'u32[]', space=smem, size = 0x4, offset = 0x4, fixed_abs, tag = 'smem constant byte address 0x4 - core index']
  #allocation1 [shape = 'u32[144,128]{1,0:T(1,128)}', space=vmem, size = 0x12000, scoped, tag = 'internal scratch']
  %s0 = inlined_call_operand.hbm [shape: bf16[16,128], index: 0, kind: input, shape index: {}]
  %s1 = inlined_call_operand.hbm [shape: bf16[128,128], index: 1, kind: input, shape index: {}]
  %s2 = inlined_call_operand.hbm [shape: f32[1,128], index: 2, kind: input, shape index: {}]
  %s3 = inlined_call_operand.hbm [shape: bf16[128,128], index: 3, kind: input, shape index: {}]
  %s4 = inlined_call_operand.hbm [shape: f32[1,128], index: 4, kind: input, shape index: {}]
  %s5 = inlined_call_operand.hbm [shape: bf16[128,128], index: 5, kind: input, shape index: {}]
  %s6 = inlined_call_operand.hbm [shape: f32[1,128], index: 6, kind: input, shape index: {}]
  %s7 = inlined_call_operand.hbm [shape: bf16[128,128], index: 7, kind: input, shape index: {}]
  %s8 = inlined_call_operand.hbm [shape: f32[1,128], index: 8, kind: input, shape index: {}]
  %s9 = inlined_call_operand.hbm [shape: f32[16,128], index: 9, kind: output, shape index: {}]
  %s10 = sld [smem:[#allocation0]]
  $region82: #{tpu_custom_call.1} parent=0
    _
  %s12 = ssub.s32 1, %s10
  %s13 = scalar_select 0, %s12, %s10
  $region1: #{tpu_custom_call.1} parent=0
    #allocation2 [shape = 'u8[4096]{0}', space=vmem, size = 0x1000, scoped, tag = 'input window, operand 0, single buffered']
    #allocation3 [shape = 's32[1]{0}', space=sflag, size = 0x4, scoped, tag = 'scoped memory for tpu_custom_call.1']
    #allocation4 [shape = 's32[1]{0}', space=sflag, size = 0x4, scoped, tag = 'scoped memory for tpu_custom_call.1']
    #allocation5 [shape = 'u8[32768]{0}', space=vmem, size = 0x8000, scoped, tag = 'input window, operand 1, single buffered']
    #allocation6 [shape = 's32[1]{0}', space=sflag, size = 0x4, scoped, tag = 'scoped memory for tpu_custom_call.1']
    #allocation7 [shape = 'u8[512]{0}', space=vmem, size = 0x400, scoped, tag = 'input window, operand 2, single buffered']
    #allocation8 [shape = 'u8[32768]{0}', space=vmem, size = 0x8000, scoped, tag = 'input window, operand 3, single buffered']
    #allocation9 [shape = 's32[1]{0}', space=sflag, size = 0x4, scoped, tag = 'scoped memory for tpu_custom_call.1']
    #allocation10 [shape = 'u8[512]{0}', space=vmem, size = 0x400, scoped, tag = 'input window, operand 4, single buffered']
    #allocation11 [shape = 'u8[32768]{0}', space=vmem, size = 0x8000, scoped, tag = 'input window, operand 5, single buffered']
    #allocation12 [shape = 's32[1]{0}', space=sflag, size = 0x4, scoped, tag = 'scoped memory for tpu_custom_call.1']
    #allocation13 [shape = 'u8[512]{0}', space=vmem, size = 0x400, scoped, tag = 'input window, operand 6, single buffered']
    #allocation14 [shape = 'u8[32768]{0}', space=vmem, size = 0x8000, scoped, tag = 'input window, operand 7, single buffered']
    #allocation15 [shape = 's32[1]{0}', space=sflag, size = 0x4, scoped, tag = 'scoped memory for tpu_custom_call.1']
    #allocation16 [shape = 'u8[512]{0}', space=vmem, size = 0x400, scoped, tag = 'input window, operand 8, single buffered']
    #allocation17 [shape = 'u8[8192]{0}', space=vmem, size = 0x2000, scoped, tag = 'output window, operand 0, single buffered']
    %14 = vsyncpa [#allocation3], 0
    %15 = vsyncpa [#allocation6], 0
    %16 = vsyncpa [#allocation9], 0
    %17 = vsyncpa [#allocation12], 0
    %18 = vsyncpa [#allocation15], 0
    %19 = vsyncpa [#allocation4], 0
    // Predicated region
    $region2: #{tpu_custom_call.1} parent=1 // pred_check
      _
    $region3: #{tpu_custom_call.1} parent=1 // pred_check_branch
      %21 = sbr.rel (0) target = $region5
    $region4: #{tpu_custom_call.1} parent=1 // pred_region
      %s23 = ssub.s32 128, 128
      %24 = vsyncadd [#allocation3], %s23
      %s25 = sshll.u32 [#allocation2], 4
      %s26 = int_to_ptr.vmem [resolvable:$true] %s25
      %31 = dma.hbm_to_vmem [thread:$0]  %s0, 128, %s26, [#allocation3], 64, 64, 4
    $region5: #{tpu_custom_call.1} parent=1 // pred_fallthru
      _
    // Predicated region
    $region6: #{tpu_custom_call.1} parent=1 // pred_check
      _
    $region7: #{tpu_custom_call.1} parent=1 // pred_check_branch
      %33 = sbr.rel (0) target = $region9
    $region8: #{tpu_custom_call.1} parent=1 // pred_region
      %s35 = ssub.s32 1024, 1024
      %36 = vsyncadd [#allocation6], %s35
      %s37 = sshll.u32 [#allocation5], 4
      %s38 = int_to_ptr.vmem [resolvable:$true] %s37
      %43 = dma.hbm_to_vmem [thread:$0]  %s1, 1024, %s38, [#allocation6], 64, 64, 4
    $region9: #{tpu_custom_call.1} parent=1 // pred_fallthru
      _
    // Predicated region
    $region10: #{tpu_custom_call.1} parent=1 // pred_check
      _
    $region11: #{tpu_custom_call.1} parent=1 // pred_check_branch
      %45 = sbr.rel (0) target = $region13
    $region12: #{tpu_custom_call.1} parent=1 // pred_region
      %s47 = ssub.s32 16, 16
      %48 = vsyncadd [#allocation6], %s47
      %s50 = sshll.u32 [#allocation7], 4
      %s51 = int_to_ptr.vmem [resolvable:$true] %s50
      %53 = dma.hbm_to_vmem [thread:$0]  %s2, 16, %s51, [#allocation6]
    $region13: #{tpu_custom_call.1} parent=1 // pred_fallthru
      _
    // Predicated region
    $region14: #{tpu_custom_call.1} parent=1 // pred_check
      _
    $region15: #{tpu_custom_call.1} parent=1 // pred_check_branch
      %55 = sbr.rel (0) target = $region17
    $region16: #{tpu_custom_call.1} parent=1 // pred_region
      %s57 = ssub.s32 1024, 1024
      %58 = vsyncadd [#allocation9], %s57
      %s59 = sshll.u32 [#allocation8], 4
      %s60 = int_to_ptr.vmem [resolvable:$true] %s59
      %65 = dma.hbm_to_vmem [thread:$0]  %s3, 1024, %s60, [#allocation9], 64, 64, 4
    $region17: #{tpu_custom_call.1} parent=1 // pred_fallthru
      _
    // Predicated region
    $region18: #{tpu_custom_call.1} parent=1 // pred_check
      _
    $region19: #{tpu_custom_call.1} parent=1 // pred_check_branch
      %67 = sbr.rel (0) target = $region21
    $region20: #{tpu_custom_call.1} parent=1 // pred_region
      %s69 = ssub.s32 16, 16
      %70 = vsyncadd [#allocation9], %s69
      %s72 = sshll.u32 [#allocation10], 4
      %s73 = int_to_ptr.vmem [resolvable:$true] %s72
      %75 = dma.hbm_to_vmem [thread:$0]  %s4, 16, %s73, [#allocation9]
    $region21: #{tpu_custom_call.1} parent=1 // pred_fallthru
      _
    // Predicated region
    $region22: #{tpu_custom_call.1} parent=1 // pred_check
      _
    $region23: #{tpu_custom_call.1} parent=1 // pred_check_branch
      %77 = sbr.rel (0) target = $region25
    $region24: #{tpu_custom_call.1} parent=1 // pred_region
      %s79 = ssub.s32 1024, 1024
      %80 = vsyncadd [#allocation12], %s79
      %s81 = sshll.u32 [#allocation11], 4
      %s82 = int_to_ptr.vmem [resolvable:$true] %s81
      %87 = dma.hbm_to_vmem [thread:$0]  %s5, 1024, %s82, [#allocation12], 64, 64, 4
    $region25: #{tpu_custom_call.1} parent=1 // pred_fallthru
      _
    // Predicated region
    $region26: #{tpu_custom_call.1} parent=1 // pred_check
      _
    $region27: #{tpu_custom_call.1} parent=1 // pred_check_branch
      %89 = sbr.rel (0) target = $region29
    $region28: #{tpu_custom_call.1} parent=1 // pred_region
      %s91 = ssub.s32 16, 16
      %92 = vsyncadd [#allocation12], %s91
      %s94 = sshll.u32 [#allocation13], 4
      %s95 = int_to_ptr.vmem [resolvable:$true] %s94
      %97 = dma.hbm_to_vmem [thread:$0]  %s6, 16, %s95, [#allocation12]
    $region29: #{tpu_custom_call.1} parent=1 // pred_fallthru
      _
    // Predicated region
    $region30: #{tpu_custom_call.1} parent=1 // pred_check
      _
    $region31: #{tpu_custom_call.1} parent=1 // pred_check_branch
      %99 = sbr.rel (0) target = $region33
    $region32: #{tpu_custom_call.1} parent=1 // pred_region
      %s101 = ssub.s32 1024, 1024
      %102 = vsyncadd [#allocation15], %s101
      %s103 = sshll.u32 [#allocation14], 4
      %s104 = int_to_ptr.vmem [resolvable:$true] %s103
      %109 = dma.hbm_to_vmem [thread:$0]  %s7, 1024, %s104, [#allocation15], 64, 64, 4
    $region33: #{tpu_custom_call.1} parent=1 // pred_fallthru
      _
    // Predicated region
    $region34: #{tpu_custom_call.1} parent=1 // pred_check
      _
    $region35: #{tpu_custom_call.1} parent=1 // pred_check_branch
      %111 = sbr.rel (0) target = $region37
    $region36: #{tpu_custom_call.1} parent=1 // pred_region
      %s113 = ssub.s32 16, 16
      %114 = vsyncadd [#allocation15], %s113
      %s116 = sshll.u32 [#allocation16], 4
      %s117 = int_to_ptr.vmem [resolvable:$true] %s116
      %119 = dma.hbm_to_vmem [thread:$0]  %s8, 16, %s117, [#allocation15]
    $region37: #{tpu_custom_call.1} parent=1 // pred_fallthru
      _
    // Predicated region
    $region38: #{tpu_custom_call.1} parent=1 // pred_check
      _
    $region39: #{tpu_custom_call.1} parent=1 // pred_check_branch
      %121 = sbr.rel (0) target = $region41
    $region40: #{tpu_custom_call.1} parent=1 // pred_region
      %122 = dma.done [#allocation3], 128
    $region41: #{tpu_custom_call.1} parent=1 // pred_fallthru
      _
    // Predicated region
    $region42: #{tpu_custom_call.1} parent=1 // pred_check
      _
    $region43: #{tpu_custom_call.1} parent=1 // pred_check_branch
      %124 = sbr.rel (0) target = $region45
    $region44: #{tpu_custom_call.1} parent=1 // pred_region
      %125 = dma.done [#allocation6], 1024
    $region45: #{tpu_custom_call.1} parent=1 // pred_fallthru
      _
    // Predicated region
    $region46: #{tpu_custom_call.1} parent=1 // pred_check
      _
    $region47: #{tpu_custom_call.1} parent=1 // pred_check_branch
      %127 = sbr.rel (0) target = $region49
    $region48: #{tpu_custom_call.1} parent=1 // pred_region
      %128 = dma.done [#allocation6], 16
    $region49: #{tpu_custom_call.1} parent=1 // pred_fallthru
      _
    // Predicated region
    $region50: #{tpu_custom_call.1} parent=1 // pred_check
      _
    $region51: #{tpu_custom_call.1} parent=1 // pred_check_branch
      %130 = sbr.rel (0) target = $region53
    $region52: #{tpu_custom_call.1} parent=1 // pred_region
      %131 = dma.done [#allocation9], 1024
    $region53: #{tpu_custom_call.1} parent=1 // pred_fallthru
      _
    // Predicated region
    $region54: #{tpu_custom_call.1} parent=1 // pred_check
      _
    $region55: #{tpu_custom_call.1} parent=1 // pred_check_branch
      %133 = sbr.rel (0) target = $region57
    $region56: #{tpu_custom_call.1} parent=1 // pred_region
      %134 = dma.done [#allocation9], 16
    $region57: #{tpu_custom_call.1} parent=1 // pred_fallthru
      _
    // Predicated region
    $region58: #{tpu_custom_call.1} parent=1 // pred_check
      _
    $region59: #{tpu_custom_call.1} parent=1 // pred_check_branch
      %136 = sbr.rel (0) target = $region61
    $region60: #{tpu_custom_call.1} parent=1 // pred_region
      %137 = dma.done [#allocation12], 1024
    $region61: #{tpu_custom_call.1} parent=1 // pred_fallthru
      _
    // Predicated region
    $region62: #{tpu_custom_call.1} parent=1 // pred_check
      _
    $region63: #{tpu_custom_call.1} parent=1 // pred_check_branch
      %139 = sbr.rel (0) target = $region65
    $region64: #{tpu_custom_call.1} parent=1 // pred_region
      %140 = dma.done [#allocation12], 16
    $region65: #{tpu_custom_call.1} parent=1 // pred_fallthru
      _
    // Predicated region
    $region66: #{tpu_custom_call.1} parent=1 // pred_check
      _
    $region67: #{tpu_custom_call.1} parent=1 // pred_check_branch
      %142 = sbr.rel (0) target = $region69
    $region68: #{tpu_custom_call.1} parent=1 // pred_region
      %143 = dma.done [#allocation15], 1024
    $region69: #{tpu_custom_call.1} parent=1 // pred_fallthru
      _
    // Predicated region
    $region70: #{tpu_custom_call.1} parent=1 // pred_check
      _
    $region71: #{tpu_custom_call.1} parent=1 // pred_check_branch
      %145 = sbr.rel (0) target = $region73
    $region72: #{tpu_custom_call.1} parent=1 // pred_region
      %146 = dma.done [#allocation15], 16
    $region73: #{tpu_custom_call.1} parent=1 // pred_fallthru
      _
    %v148 = vld [vmem:[#allocation2] sm:$0xf]
    %v149 = vld [vmem:[#allocation2 + $0x4] sm:$0xf]
    %v150 = vld [vmem:[#allocation5] sm:$0xf]
    %v151 = vld [vmem:[#allocation5 + $0x4] sm:$0xf]
    %v152 = vld [vmem:[#allocation5 + $0x8] sm:$0xf]
    %v153 = vld [vmem:[#allocation5 + $0xc] sm:$0xf]
    %v154 = vld [vmem:[#allocation5 + $0x10] sm:$0xf]
    %v155 = vld [vmem:[#allocation5 + $0x14] sm:$0xf]
    %v156 = vld [vmem:[#allocation5 + $0x18] sm:$0xf]
    %v157 = vld [vmem:[#allocation5 + $0x1c] sm:$0xf]
    %v158 = vld [vmem:[#allocation5 + $0x20] sm:$0xf]
    %v159 = vld [vmem:[#allocation5 + $0x24] sm:$0xf]
    %v160 = vld [vmem:[#allocation5 + $0x28] sm:$0xf]
    %v161 = vld [vmem:[#allocation5 + $0x2c] sm:$0xf]
    %v162 = vld [vmem:[#allocation5 + $0x30] sm:$0xf]
    %v163 = vld [vmem:[#allocation5 + $0x34] sm:$0xf]
    %v164 = vld [vmem:[#allocation5 + $0x38] sm:$0xf]
    %v165 = vld [vmem:[#allocation5 + $0x3c] sm:$0xf]
    %v166 = vld [vmem:[#allocation7] sm:$0x1]
    %v168 = vlaneseq
    %v169 = vshrl.u32 %v168, 7
    %v170 = vsub.s32 0, %v169
    %v171 = vrot.slane %v166, %v170
    %v175 = vunpack.c.l.b16 %v148
    %v176 = vunpack.c.l.b16 %v149
    %v177 = vpack.c.b16 %v176, %v175
    %v195 = vunpack.c.l.b16 %v150
    %v196 = vunpack.c.l.b16 %v151
    %v197 = vunpack.c.l.b16 %v152
    %v198 = vunpack.c.l.b16 %v153
    %v199 = vunpack.c.l.b16 %v154
    %v200 = vunpack.c.l.b16 %v155
    %v201 = vunpack.c.l.b16 %v156
    %v202 = vunpack.c.l.b16 %v157
    %v203 = vunpack.c.l.b16 %v158
    %v204 = vunpack.c.l.b16 %v159
    %v205 = vunpack.c.l.b16 %v160
    %v206 = vunpack.c.l.b16 %v161
    %v207 = vunpack.c.l.b16 %v162
    %v208 = vunpack.c.l.b16 %v163
    %v209 = vunpack.c.l.b16 %v164
    %v210 = vunpack.c.l.b16 %v165
    %v211 = vpack.c.b16 %v196, %v195
    %v212 = vpack.c.b16 %v198, %v197
    %v213 = vpack.c.b16 %v200, %v199
    %v214 = vpack.c.b16 %v202, %v201
    %v215 = vpack.c.b16 %v204, %v203
    %v216 = vpack.c.b16 %v206, %v205
    %v217 = vpack.c.b16 %v208, %v207
    %v218 = vpack.c.b16 %v210, %v209
    %227 = vmatprep.subr.bf16.mxu0 0
    %228 = vmatpush1.bf16.msra.mxu0 %v211
    %229 = vmatprep.subr.bf16.mxu0 0
    %230 = vmatpush1.bf16.msra.mxu0 %v212
    %231 = vmatprep.subr.bf16.mxu0 0
    %232 = vmatpush1.bf16.msra.mxu0 %v213
    %233 = vmatprep.subr.bf16.mxu0 0
    %234 = vmatpush1.bf16.msra.mxu0 %v214
    %235 = vmatprep.subr.bf16.mxu0 0
    %236 = vmatpush1.bf16.msra.mxu0 %v215
    %237 = vmatprep.subr.bf16.mxu0 0
    %238 = vmatpush1.bf16.msra.mxu0 %v216
    %239 = vmatprep.subr.bf16.mxu0 0
    %240 = vmatpush1.bf16.msra.mxu0 %v217
    %241 = vmatprep.subr.bf16.mxu0 0
    %242 = vmatpush1.bf16.msra.mxu0 %v218
    %243 = vmatprep.subr.bf16.mxu0 0
    %244 = vmatpush1.bf16.msra.mxu0 0
    %245 = vmatprep.subr.bf16.mxu0 0
    %246 = vmatpush1.bf16.msra.mxu0 0
    %247 = vmatprep.subr.bf16.mxu0 0
    %248 = vmatpush1.bf16.msra.mxu0 0
    %249 = vmatprep.subr.bf16.mxu0 0
    %250 = vmatpush1.bf16.msra.mxu0 0
    %251 = vmatprep.subr.bf16.mxu0 0
    %252 = vmatpush1.bf16.msra.mxu0 0
    %253 = vmatprep.subr.bf16.mxu0 0
    %254 = vmatpush1.bf16.msra.mxu0 0
    %255 = vmatprep.subr.bf16.mxu0 0
    %256 = vmatpush1.bf16.msra.mxu0 0
    %257 = vmatprep.subr.bf16.mxu0 0
    %258 = vmatpush1.bf16.msra.mxu0 0
    %259 = vmatprep.mubr.bf16.mxu0 0
    %260 = vmatmul.mubr.bf16.gmra.mrb[0].mxu0 %v177
    %v261 = vpop.f32.mrb[0].mxu0
    %v262 = vadd.f32 %v171, %v261
    %v263 = vpop.f32.mrb[0].mxu0
    %v264 = vpop.f32.mrb[0].mxu0
    %v265 = vadd.f32 %v171, %v264
    %v266 = vpop.f32.mrb[0].mxu0
    %267 = vdwg.mxu0
    %v268 = vmax.f32 %v262, 0.0
    %v269 = vmax.f32 %v265, 0.0
    %v270 = vpack.c.bf16 %v269, %v268
    %v271 = vld [vmem:[#allocation8] sm:$0xf]
    %v272 = vld [vmem:[#allocation8 + $0x4] sm:$0xf]
    %v273 = vld [vmem:[#allocation8 + $0x8] sm:$0xf]
    %v274 = vld [vmem:[#allocation8 + $0xc] sm:$0xf]
    %v275 = vld [vmem:[#allocation8 + $0x10] sm:$0xf]
    %v276 = vld [vmem:[#allocation8 + $0x14] sm:$0xf]
    %v277 = vld [vmem:[#allocation8 + $0x18] sm:$0xf]
    %v278 = vld [vmem:[#allocation8 + $0x1c] sm:$0xf]
    %v279 = vld [vmem:[#allocation8 + $0x20] sm:$0xf]
    %v280 = vld [vmem:[#allocation8 + $0x24] sm:$0xf]
    %v281 = vld [vmem:[#allocation8 + $0x28] sm:$0xf]
    %v282 = vld [vmem:[#allocation8 + $0x2c] sm:$0xf]
    %v283 = vld [vmem:[#allocation8 + $0x30] sm:$0xf]
    %v284 = vld [vmem:[#allocation8 + $0x34] sm:$0xf]
    %v285 = vld [vmem:[#allocation8 + $0x38] sm:$0xf]
    %v286 = vld [vmem:[#allocation8 + $0x3c] sm:$0xf]
    %v287 = vld [vmem:[#allocation10] sm:$0x1]
    %v289 = vlaneseq
    %v290 = vshrl.u32 %v289, 7
    %v291 = vsub.s32 0, %v290
    %v292 = vrot.slane %v287, %v291
    %v310 = vunpack.c.l.b16 %v271
    %v311 = vunpack.c.l.b16 %v272
    %v312 = vunpack.c.l.b16 %v273
    %v313 = vunpack.c.l.b16 %v274
    %v314 = vunpack.c.l.b16 %v275
    %v315 = vunpack.c.l.b16 %v276
    %v316 = vunpack.c.l.b16 %v277
    %v317 = vunpack.c.l.b16 %v278
    %v318 = vunpack.c.l.b16 %v279
    %v319 = vunpack.c.l.b16 %v280
    %v320 = vunpack.c.l.b16 %v281
    %v321 = vunpack.c.l.b16 %v282
    %v322 = vunpack.c.l.b16 %v283
    %v323 = vunpack.c.l.b16 %v284
    %v324 = vunpack.c.l.b16 %v285
    %v325 = vunpack.c.l.b16 %v286
    %v326 = vpack.c.b16 %v311, %v310
    %v327 = vpack.c.b16 %v313, %v312
    %v328 = vpack.c.b16 %v315, %v314
    %v329 = vpack.c.b16 %v317, %v316
    %v330 = vpack.c.b16 %v319, %v318
    %v331 = vpack.c.b16 %v321, %v320
    %v332 = vpack.c.b16 %v323, %v322
    %v333 = vpack.c.b16 %v325, %v324
    %342 = vmatprep.subr.bf16.mxu0 0
    %343 = vmatpush1.bf16.msra.mxu0 %v326
    %344 = vmatprep.subr.bf16.mxu0 0
    %345 = vmatpush1.bf16.msra.mxu0 %v327
    %346 = vmatprep.subr.bf16.mxu0 0
    %347 = vmatpush1.bf16.msra.mxu0 %v328
    %348 = vmatprep.subr.bf16.mxu0 0
    %349 = vmatpush1.bf16.msra.mxu0 %v329
    %350 = vmatprep.subr.bf16.mxu0 0
    %351 = vmatpush1.bf16.msra.mxu0 %v330
    %352 = vmatprep.subr.bf16.mxu0 0
    %353 = vmatpush1.bf16.msra.mxu0 %v331
    %354 = vmatprep.subr.bf16.mxu0 0
    %355 = vmatpush1.bf16.msra.mxu0 %v332
    %356 = vmatprep.subr.bf16.mxu0 0
    %357 = vmatpush1.bf16.msra.mxu0 %v333
    %358 = vmatprep.subr.bf16.mxu0 0
    %359 = vmatpush1.bf16.msra.mxu0 0
    %360 = vmatprep.subr.bf16.mxu0 0
    %361 = vmatpush1.bf16.msra.mxu0 0
    %362 = vmatprep.subr.bf16.mxu0 0
    %363 = vmatpush1.bf16.msra.mxu0 0
    %364 = vmatprep.subr.bf16.mxu0 0
    %365 = vmatpush1.bf16.msra.mxu0 0
    %366 = vmatprep.subr.bf16.mxu0 0
    %367 = vmatpush1.bf16.msra.mxu0 0
    %368 = vmatprep.subr.bf16.mxu0 0
    %369 = vmatpush1.bf16.msra.mxu0 0
    %370 = vmatprep.subr.bf16.mxu0 0
    %371 = vmatpush1.bf16.msra.mxu0 0
    %372 = vmatprep.subr.bf16.mxu0 0
    %373 = vmatpush1.bf16.msra.mxu0 0
    %374 = vmatprep.mubr.bf16.mxu0 0
    %375 = vmatmul.mubr.bf16.gmra.mrb[0].mxu0 %v270
    %v376 = vpop.f32.mrb[0].mxu0
    %v377 = vadd.f32 %v292, %v376
    %v378 = vpop.f32.mrb[0].mxu0
    %v379 = vpop.f32.mrb[0].mxu0
    %v380 = vadd.f32 %v292, %v379
    %v381 = vpop.f32.mrb[0].mxu0
    %382 = vdwg.mxu0
    %v383 = vmax.f32 %v377, 0.0
    %v384 = vmax.f32 %v380, 0.0
    %v385 = vpack.c.bf16 %v384, %v383
    %v386 = vld [vmem:[#allocation11] sm:$0xf]
    %v387 = vld [vmem:[#allocation11 + $0x4] sm:$0xf]
    %v388 = vld [vmem:[#allocation11 + $0x8] sm:$0xf]
    %v389 = vld [vmem:[#allocation11 + $0xc] sm:$0xf]
    %v390 = vld [vmem:[#allocation11 + $0x10] sm:$0xf]
    %v391 = vld [vmem:[#allocation11 + $0x14] sm:$0xf]
    %v392 = vld [vmem:[#allocation11 + $0x18] sm:$0xf]
    %v393 = vld [vmem:[#allocation11 + $0x1c] sm:$0xf]
    %v394 = vld [vmem:[#allocation11 + $0x20] sm:$0xf]
    %v395 = vld [vmem:[#allocation11 + $0x24] sm:$0xf]
    %v396 = vld [vmem:[#allocation11 + $0x28] sm:$0xf]
    %v397 = vld [vmem:[#allocation11 + $0x2c] sm:$0xf]
    %v398 = vld [vmem:[#allocation11 + $0x30] sm:$0xf]
    %v399 = vld [vmem:[#allocation11 + $0x34] sm:$0xf]
    %v400 = vld [vmem:[#allocation11 + $0x38] sm:$0xf]
    %v401 = vld [vmem:[#allocation11 + $0x3c] sm:$0xf]
    %v402 = vld [vmem:[#allocation13] sm:$0x1]
    %v404 = vlaneseq
    %v405 = vshrl.u32 %v404, 7
    %v406 = vsub.s32 0, %v405
    %v407 = vrot.slane %v402, %v406
    %v425 = vunpack.c.l.b16 %v386
    %v426 = vunpack.c.l.b16 %v387
    %v427 = vunpack.c.l.b16 %v388
    %v428 = vunpack.c.l.b16 %v389
    %v429 = vunpack.c.l.b16 %v390
    %v430 = vunpack.c.l.b16 %v391
    %v431 = vunpack.c.l.b16 %v392
    %v432 = vunpack.c.l.b16 %v393
    %v433 = vunpack.c.l.b16 %v394
    %v434 = vunpack.c.l.b16 %v395
    %v435 = vunpack.c.l.b16 %v396
    %v436 = vunpack.c.l.b16 %v397
    %v437 = vunpack.c.l.b16 %v398
    %v438 = vunpack.c.l.b16 %v399
    %v439 = vunpack.c.l.b16 %v400
    %v440 = vunpack.c.l.b16 %v401
    %v441 = vpack.c.b16 %v426, %v425
    %v442 = vpack.c.b16 %v428, %v427
    %v443 = vpack.c.b16 %v430, %v429
    %v444 = vpack.c.b16 %v432, %v431
    %v445 = vpack.c.b16 %v434, %v433
    %v446 = vpack.c.b16 %v436, %v435
    %v447 = vpack.c.b16 %v438, %v437
    %v448 = vpack.c.b16 %v440, %v439
    %457 = vmatprep.subr.bf16.mxu0 0
    %458 = vmatpush1.bf16.msra.mxu0 %v441
    %459 = vmatprep.subr.bf16.mxu0 0
    %460 = vmatpush1.bf16.msra.mxu0 %v442
    %461 = vmatprep.subr.bf16.mxu0 0
    %462 = vmatpush1.bf16.msra.mxu0 %v443
    %463 = vmatprep.subr.bf16.mxu0 0
    %464 = vmatpush1.bf16.msra.mxu0 %v444
    %465 = vmatprep.subr.bf16.mxu0 0
    %466 = vmatpush1.bf16.msra.mxu0 %v445
    %467 = vmatprep.subr.bf16.mxu0 0
    %468 = vmatpush1.bf16.msra.mxu0 %v446
    %469 = vmatprep.subr.bf16.mxu0 0
    %470 = vmatpush1.bf16.msra.mxu0 %v447
    %471 = vmatprep.subr.bf16.mxu0 0
    %472 = vmatpush1.bf16.msra.mxu0 %v448
    %473 = vmatprep.subr.bf16.mxu0 0
    %474 = vmatpush1.bf16.msra.mxu0 0
    %475 = vmatprep.subr.bf16.mxu0 0
    %476 = vmatpush1.bf16.msra.mxu0 0
    %477 = vmatprep.subr.bf16.mxu0 0
    %478 = vmatpush1.bf16.msra.mxu0 0
    %479 = vmatprep.subr.bf16.mxu0 0
    %480 = vmatpush1.bf16.msra.mxu0 0
    %481 = vmatprep.subr.bf16.mxu0 0
    %482 = vmatpush1.bf16.msra.mxu0 0
    %483 = vmatprep.subr.bf16.mxu0 0
    %484 = vmatpush1.bf16.msra.mxu0 0
    %485 = vmatprep.subr.bf16.mxu0 0
    %486 = vmatpush1.bf16.msra.mxu0 0
    %487 = vmatprep.subr.bf16.mxu0 0
    %488 = vmatpush1.bf16.msra.mxu0 0
    %489 = vmatprep.mubr.bf16.mxu0 0
    %490 = vmatmul.mubr.bf16.gmra.mrb[0].mxu0 %v385
    %v491 = vpop.f32.mrb[0].mxu0
    %v492 = vadd.f32 %v407, %v491
    %v493 = vpop.f32.mrb[0].mxu0
    %v494 = vpop.f32.mrb[0].mxu0
    %v495 = vadd.f32 %v407, %v494
    %v496 = vpop.f32.mrb[0].mxu0
    %497 = vdwg.mxu0
    %v498 = vmax.f32 %v492, 0.0
    %v499 = vmax.f32 %v495, 0.0
    %v500 = vpack.c.bf16 %v499, %v498
    %v501 = vld [vmem:[#allocation14] sm:$0xf]
    %v502 = vld [vmem:[#allocation14 + $0x4] sm:$0xf]
    %v503 = vld [vmem:[#allocation14 + $0x8] sm:$0xf]
    %v504 = vld [vmem:[#allocation14 + $0xc] sm:$0xf]
    %v505 = vld [vmem:[#allocation14 + $0x10] sm:$0xf]
    %v506 = vld [vmem:[#allocation14 + $0x14] sm:$0xf]
    %v507 = vld [vmem:[#allocation14 + $0x18] sm:$0xf]
    %v508 = vld [vmem:[#allocation14 + $0x1c] sm:$0xf]
    %v509 = vld [vmem:[#allocation14 + $0x20] sm:$0xf]
    %v510 = vld [vmem:[#allocation14 + $0x24] sm:$0xf]
    %v511 = vld [vmem:[#allocation14 + $0x28] sm:$0xf]
    %v512 = vld [vmem:[#allocation14 + $0x2c] sm:$0xf]
    %v513 = vld [vmem:[#allocation14 + $0x30] sm:$0xf]
    %v514 = vld [vmem:[#allocation14 + $0x34] sm:$0xf]
    %v515 = vld [vmem:[#allocation14 + $0x38] sm:$0xf]
    %v516 = vld [vmem:[#allocation14 + $0x3c] sm:$0xf]
    %v517 = vld [vmem:[#allocation16] sm:$0x1]
    %v519 = vlaneseq
    %v520 = vshrl.u32 %v519, 7
    %v521 = vsub.s32 0, %v520
    %v522 = vrot.slane %v517, %v521
    %v540 = vunpack.c.l.b16 %v501
    %v541 = vunpack.c.l.b16 %v502
    %v542 = vunpack.c.l.b16 %v503
    %v543 = vunpack.c.l.b16 %v504
    %v544 = vunpack.c.l.b16 %v505
    %v545 = vunpack.c.l.b16 %v506
    %v546 = vunpack.c.l.b16 %v507
    %v547 = vunpack.c.l.b16 %v508
    %v548 = vunpack.c.l.b16 %v509
    %v549 = vunpack.c.l.b16 %v510
    %v550 = vunpack.c.l.b16 %v511
    %v551 = vunpack.c.l.b16 %v512
    %v552 = vunpack.c.l.b16 %v513
    %v553 = vunpack.c.l.b16 %v514
    %v554 = vunpack.c.l.b16 %v515
    %v555 = vunpack.c.l.b16 %v516
    %v556 = vpack.c.b16 %v541, %v540
    %v557 = vpack.c.b16 %v543, %v542
    %v558 = vpack.c.b16 %v545, %v544
    %v559 = vpack.c.b16 %v547, %v546
    %v560 = vpack.c.b16 %v549, %v548
    %v561 = vpack.c.b16 %v551, %v550
    %v562 = vpack.c.b16 %v553, %v552
    %v563 = vpack.c.b16 %v555, %v554
    %572 = vmatprep.subr.bf16.mxu0 0
    %573 = vmatpush1.bf16.msra.mxu0 %v556
    %574 = vmatprep.subr.bf16.mxu0 0
    %575 = vmatpush1.bf16.msra.mxu0 %v557
    %576 = vmatprep.subr.bf16.mxu0 0
    %577 = vmatpush1.bf16.msra.mxu0 %v558
    %578 = vmatprep.subr.bf16.mxu0 0
    %579 = vmatpush1.bf16.msra.mxu0 %v559
    %580 = vmatprep.subr.bf16.mxu0 0
    %581 = vmatpush1.bf16.msra.mxu0 %v560
    %582 = vmatprep.subr.bf16.mxu0 0
    %583 = vmatpush1.bf16.msra.mxu0 %v561
    %584 = vmatprep.subr.bf16.mxu0 0
    %585 = vmatpush1.bf16.msra.mxu0 %v562
    %586 = vmatprep.subr.bf16.mxu0 0
    %587 = vmatpush1.bf16.msra.mxu0 %v563
    %588 = vmatprep.subr.bf16.mxu0 0
    %589 = vmatpush1.bf16.msra.mxu0 0
    %590 = vmatprep.subr.bf16.mxu0 0
    %591 = vmatpush1.bf16.msra.mxu0 0
    %592 = vmatprep.subr.bf16.mxu0 0
    %593 = vmatpush1.bf16.msra.mxu0 0
    %594 = vmatprep.subr.bf16.mxu0 0
    %595 = vmatpush1.bf16.msra.mxu0 0
    %596 = vmatprep.subr.bf16.mxu0 0
    %597 = vmatpush1.bf16.msra.mxu0 0
    %598 = vmatprep.subr.bf16.mxu0 0
    %599 = vmatpush1.bf16.msra.mxu0 0
    %600 = vmatprep.subr.bf16.mxu0 0
    %601 = vmatpush1.bf16.msra.mxu0 0
    %602 = vmatprep.subr.bf16.mxu0 0
    %603 = vmatpush1.bf16.msra.mxu0 0
    %604 = vmatprep.mubr.bf16.mxu0 0
    %605 = vmatmul.mubr.bf16.gmra.mrb[0].mxu0 %v500
    %v606 = vpop.f32.mrb[0].mxu0
    %v607 = vadd.f32 %v522, %v606
    %v608 = vpop.f32.mrb[0].mxu0
    %v609 = vpop.f32.mrb[0].mxu0
    %v610 = vadd.f32 %v522, %v609
    %v611 = vpop.f32.mrb[0].mxu0
    %612 = vdwg.mxu0
    %613 = vst [vmem:[#allocation17] sm:$0xff] %v607
    %614 = vst [vmem:[#allocation17 + $0x8] sm:$0xff] %v610
    // Predicated region
    $region74: #{tpu_custom_call.1} parent=1 // pred_check
      _
    $region75: #{tpu_custom_call.1} parent=1 // pred_check_branch
      %616 = sbr.rel (0) target = $region77
    $region76: #{tpu_custom_call.1} parent=1 // pred_region
      %s618 = ssub.s32 256, 256
      %619 = vsyncadd [#allocation4], %s618
      %s620 = sshll.u32 [#allocation17], 4
      %s621 = int_to_ptr.vmem [resolvable:$true] %s620
      %626 = dma.vmem_to_hbm [thread:$0]  %s621, 256, %s9, [#allocation4], 128, 128, 8
    $region77: #{tpu_custom_call.1} parent=1 // pred_fallthru
      _
    // Predicated region
    $region78: #{tpu_custom_call.1} parent=1 // pred_check
      _
    $region79: #{tpu_custom_call.1} parent=1 // pred_check_branch
      %628 = sbr.rel (0) target = $region81
    $region80: #{tpu_custom_call.1} parent=1 // pred_region
      %629 = dma.done [#allocation4], 256
    $region81: #{tpu_custom_call.1} parent=1 // pred_fallthru
      _
    %630 = vsyncpa [#allocation3], 1
    %631 = vsyncpa [#allocation6], 1
    %632 = vsyncpa [#allocation9], 1
    %633 = vsyncpa [#allocation12], 1
    %634 = vsyncpa [#allocation15], 1
    %635 = vsyncpa [#allocation4], 1

</llo_original>
